<compile_context>
chip_gen: v5e
topology: v5e:2x2
jax: 0.10.0
libtpu: 0.0.40
codegen_flags: <defaults>
</compile_context>

<pallas_src>
import functools
import math

import jax
import jax.numpy as jnp
import numpy as np
from jax.experimental import pallas as pl
from jax.experimental.pallas import tpu as pltpu


# Tap ordering j = (dy + 1) * 3 + (dx + 1) matches the 3x3 weight layout.
_TAPS = tuple((dy, dx) for dy in (-1, 0, 1) for dx in (-1, 0, 1))


def _make_tap_masks(H, W):
    """(9, H*W) f32 0/1 masks: tap j at output pixel p=(h,w) is valid iff the
    source pixel (h+dy, w+dx) lies inside the image (3x3 conv zero padding).
    Built on the host (static H, W) so the kernel needs no iota / div / mod."""
    h = np.arange(H * W) // W
    w = np.arange(H * W) % W
    rows = []
    for dy, dx in _TAPS:
        ok = (h + dy >= 0) & (h + dy <= H - 1) & (w + dx >= 0) & (w + dx <= W - 1)
        rows.append(ok.astype(np.float32))
    return jnp.asarray(np.stack(rows))


# ------------------------------ fused kernel --------------------------------

def _bottle2neck_kernel(x_ref, mask_ref, w1_ref, s1_ref, b1_ref,
                        wc_ref, sc_ref, bc_ref,
                        w3_ref, s3_ref, b3_ref,
                        o_ref, y_ref, *, W):
    # Channel-major layout, M = H*W on lanes.
    #   x_ref:  (1, Cin, M)            bf16    mask_ref: (9, M) f32
    #   w1_ref: (ws, Cin)              bf16    s1/b1:    (ws, 1) f32
    #   wc_ref: (S-1, width, 9*width)  bf16    sc/bc:    (S-1, width, 1) f32
    #   w3_ref: (Cout, ws)             bf16    s3/b3:    (Cout, 1) f32
    #   o_ref:  (1, Cout, M)           bf16
    #   y_ref:  VMEM (ws, M) bf16 scratch -- conv1 output, overwritten group by
    #           group with the stage outputs => doubles as the concat buffer.
    n_stages, width, _ = wc_ref.shape
    M = x_ref.shape[2]

    x2d = x_ref[0]                                            # (Cin, M) bf16

    # ---- conv1 (1x1) + bn1 + relu : lane-dense MXU matmul, f32 accumulate --
    y = jnp.dot(w1_ref[...], x2d, preferred_element_type=jnp.float32)
    y = jnp.maximum(y * s1_ref[...] + b1_ref[...], 0.0)       # (ws, M) f32
    # Park y in VMEM scratch immediately (bounds its live range).
    y_ref[...] = y.astype(jnp.bfloat16)

    # ---- hierarchical 3x3 cascade: roll+mask taps, 9 accumulating matmuls --
    sp = None
    for i in range(n_stages):
        g = y_ref[i * width:(i + 1) * width, :].astype(jnp.float32)
        inp = g if i == 0 else sp + g                         # (width, M) f32
        wci = wc_ref[i]                                       # (width, 9*width)
        pre = jnp.zeros((width, M), jnp.float32)
        for j, (dy, dx) in enumerate(_TAPS):
            off = dy * W + dx            # flat source offset for this tap
            if off == 0:
                tap = inp                                     # center tap
            else:
                tap = pltpu.roll(inp, (-off) % M, axis=1)     # XLU lane shift
                tap = tap * mask_ref[j:j + 1, :]              # zero the wrap
            w_blk = wci[:, j * width:(j + 1) * width]         # (width, width)
            pre = pre + jnp.dot(w_blk, tap.astype(jnp.bfloat16),
                                preferred_element_type=jnp.float32)
        sp = jnp.maximum(pre * sc_ref[i] + bc_ref[i], 0.0)    # bn + relu, f32
        # Overwrite group i in place -> y_ref becomes the concat buffer; the
        # untouched last group is the stype='normal' pass-through.
        y_ref[i * width:(i + 1) * width, :] = sp.astype(jnp.bfloat16)

    # ---- conv3 (1x1) + bn3 + residual + relu -------------------------------
    out = jnp.dot(w3_ref[...], y_ref[...], preferred_element_type=jnp.float32)
    out = out * s3_ref[...] + b3_ref[...] + x2d.astype(jnp.float32)
    o_ref[0] = jnp.maximum(out, 0.0).astype(o_ref.dtype)


# -------------------------------- wrapper ------------------------------------

def _bottle2neck_pallas(x_flat, masks, w1t, s1, b1, wct, sc, bc, w3t, s3, b3, *, W):
    N, Cin, M = x_flat.shape
    n_stages, width, _ = wct.shape
    ws = width * (n_stages + 1)
    Cout = w3t.shape[0]
    assert Cin == Cout, "identity residual requires inplanes == planes*expansion"

    kernel = functools.partial(_bottle2neck_kernel, W=W)
    grid_spec = pltpu.PrefetchScalarGridSpec(
        num_scalar_prefetch=0,
        grid=(N,),
        in_specs=[
            pl.BlockSpec((1, Cin, M), lambda n: (n, 0, 0)),
            pl.BlockSpec((9, M), lambda n: (0, 0)),
            pl.BlockSpec((ws, Cin), lambda n: (0, 0)),
            pl.BlockSpec((ws, 1), lambda n: (0, 0)),
            pl.BlockSpec((ws, 1), lambda n: (0, 0)),
            pl.BlockSpec((n_stages, width, 9 * width), lambda n: (0, 0, 0)),
            pl.BlockSpec((n_stages, width, 1), lambda n: (0, 0, 0)),
            pl.BlockSpec((n_stages, width, 1), lambda n: (0, 0, 0)),
            pl.BlockSpec((Cout, ws), lambda n: (0, 0)),
            pl.BlockSpec((Cout, 1), lambda n: (0, 0)),
            pl.BlockSpec((Cout, 1), lambda n: (0, 0)),
        ],
        out_specs=pl.BlockSpec((1, Cout, M), lambda n: (n, 0, 0)),
        scratch_shapes=[pltpu.VMEM((ws, M), jnp.bfloat16)],   # y / concat buf
    )
    return pl.pallas_call(
        kernel,
        out_shape=jax.ShapeDtypeStruct((N, Cout, M), jnp.bfloat16),
        grid_spec=grid_spec,
        compiler_params=pltpu.CompilerParams(
            dimension_semantics=("parallel",),
            # >32 MiB default helps v5e/v6e (128 MiB physical VMEM) and stays
            # within the ~48 MiB guidance for v7x (64 MiB physical, 2 TCs).
            vmem_limit_bytes=48 * 1024 * 1024,
        ),
    )(x_flat, masks, w1t, s1, b1, wct, sc, bc, w3t, s3, b3)


@jax.jit
def bottle2neck_forward(x_nchw, params):
    N, Cin, H, W = x_nchw.shape
    # Channel-major == NCHW with spatial flattened: free reshape, no transpose.
    x_flat = x_nchw.reshape(N, Cin, H * W).astype(jnp.bfloat16)
    masks = _make_tap_masks(H, W)
    out = _bottle2neck_pallas(
        x_flat, masks,
        params['w1t'], params['bn1_s'], params['bn1_b'],
        params['wct'], params['bnc_s'], params['bnc_b'],
        params['w3t'], params['bn3_s'], params['bn3_b'], W=W)
    return out.reshape(N, out.shape[1], H, W)                  # bf16 NCHW


# --------------------------- parameter set-up --------------------------------

def _bn_affine(gamma, beta, mean, var, eps=1e-5):
    s = gamma / jnp.sqrt(var + eps)
    return s.reshape(-1, 1), (beta - mean * s).reshape(-1, 1)


def init_params(key, inplanes, planes, scale=4, expansion=4):
    width = int(math.floor(planes / scale))
    ws = width * scale
    cout = planes * expansion
    keys = jax.random.split(key, 64)
    ki = iter(range(64))

    def bn_params(c):
        gamma = 0.5 + jax.random.uniform(keys[next(ki)], (c,), jnp.float32)
        beta = 0.1 * jax.random.normal(keys[next(ki)], (c,), jnp.float32)
        mean = 0.1 * jax.random.normal(keys[next(ki)], (c,), jnp.float32)
        var = 0.5 + jax.random.uniform(keys[next(ki)], (c,), jnp.float32)
        return _bn_affine(gamma, beta, mean, var)

    p = {}
    p['w1t'] = (0.1 * jax.random.normal(keys[next(ki)], (ws, inplanes),
                                        jnp.float32)).astype(jnp.bfloat16)
    p['bn1_s'], p['bn1_b'] = bn_params(ws)

    wcs, scs, bcs = [], [], []
    for _ in range(scale - 1):
        # columns ordered (ky, kx, cin): reshape -> (out, 3, 3, in)
        w = 0.1 * jax.random.normal(keys[next(ki)], (width, 9 * width), jnp.float32)
        s, b = bn_params(width)
        wcs.append(w.astype(jnp.bfloat16)); scs.append(s); bcs.append(b)
    p['wct'] = jnp.stack(wcs)                  # (scale-1, width, 9*width) bf16
    p['bnc_s'] = jnp.stack(scs)                # (scale-1, width, 1) f32
    p['bnc_b'] = jnp.stack(bcs)

    p['w3t'] = (0.1 * jax.random.normal(keys[next(ki)], (cout, ws),
                                        jnp.float32)).astype(jnp.bfloat16)
    p['bn3_s'], p['bn3_b'] = bn_params(cout)
    return p


# --------------------------- pure-JAX reference -------------------------------

def bottle2neck_ref(x_nchw, params):
    n_stages, width, _ = params['wct'].shape
    scale = n_stages + 1
    ws = width * scale
    dn = ('NHWC', 'HWIO', 'NHWC')
    # same bf16 quantization of the input as the kernel path, then f32 math
    x = jnp.transpose(x_nchw, (0, 2, 3, 1)).astype(jnp.bfloat16).astype(jnp.float32)

    def conv(xx, w_hwio, pad):
        return jax.lax.conv_general_dilated(
            xx, w_hwio, (1, 1), pad, dimension_numbers=dn,
            precision=jax.lax.Precision.HIGHEST)

    Cin = x.shape[-1]
    w1 = params['w1t'].astype(jnp.float32).T.reshape(1, 1, Cin, ws)
    y = conv(x, w1, 'VALID')
    y = jnp.maximum(y * params['bn1_s'][:, 0] + params['bn1_b'][:, 0], 0.0)

    spx = [y[..., i * width:(i + 1) * width] for i in range(scale)]
    outs = []
    sp = None
    for i in range(n_stages):
        sp = spx[i] if i == 0 else sp + spx[i]
        w = params['wct'][i].astype(jnp.float32).reshape(width, 3, 3, width)
        w = jnp.transpose(w, (1, 2, 3, 0))                     # HWIO
        sp = conv(sp, w, [(1, 1), (1, 1)])
        sp = jnp.maximum(sp * params['bnc_s'][i][:, 0] + params['bnc_b'][i][:, 0], 0.0)
        outs.append(sp)
    outs.append(spx[scale - 1])
    cat = jnp.concatenate(outs, axis=-1)

    w3 = params['w3t'].astype(jnp.float32).T.reshape(1, 1, ws, -1)
    o = conv(cat, w3, 'VALID')
    o = o * params['bn3_s'][:, 0] + params['bn3_b'][:, 0]
    o = jnp.maximum(o + x, 0.0)
    return jnp.transpose(o, (0, 3, 1, 2))


# ----------------------------------- main -------------------------------------

if __name__ == "__main__":
    # inplanes == planes * expansion so the identity residual (downsample=None)
    # is valid; scale=4 -> width=2.
    N, inplanes, planes, Hs, Ws = 2, 32, 8, 16, 16

    key = jax.random.PRNGKey(0)
    kx, kp = jax.random.split(key)
    x = jax.random.normal(kx, (N, inplanes, Hs, Ws), jnp.float32)
    params = init_params(kp, inplanes, planes, scale=4, expansion=4)

    out = jax.block_until_ready(bottle2neck_forward(x, params))
    ref = jax.block_until_ready(bottle2neck_ref(x, params))

    assert out.shape == (N, planes * 4, Hs, Ws), out.shape
    out32 = out.astype(jnp.float32)
    assert bool(jnp.all(jnp.isfinite(out32)))
    max_err = float(jnp.max(jnp.abs(out32 - ref)))
    assert jnp.allclose(out32, ref, atol=3e-2, rtol=3e-2), max_err

    print("KERNEL_OK")
</pallas_src>

<mosaic_0001>
module attributes {stable_mosaic.version = 11 : i64} {
  func.func @_bottle2neck_kernel(%arg0: i32, %arg1: memref<1x32x256xbf16, #tpu.memory_space<vmem>>, %arg2: memref<9x256xf32, #tpu.memory_space<vmem>>, %arg3: memref<8x32xbf16, #tpu.memory_space<vmem>>, %arg4: memref<8x1xf32, #tpu.memory_space<vmem>>, %arg5: memref<8x1xf32, #tpu.memory_space<vmem>>, %arg6: memref<3x2x18xbf16, #tpu.memory_space<vmem>>, %arg7: memref<3x2x1xf32, #tpu.memory_space<vmem>>, %arg8: memref<3x2x1xf32, #tpu.memory_space<vmem>>, %arg9: memref<32x8xbf16, #tpu.memory_space<vmem>>, %arg10: memref<32x1xf32, #tpu.memory_space<vmem>>, %arg11: memref<32x1xf32, #tpu.memory_space<vmem>>, %arg12: memref<1x32x256xbf16, #tpu.memory_space<vmem>>, %arg13: memref<8x256xbf16, #tpu.memory_space<vmem>>) attributes {dimension_semantics = [#tpu.dimension_semantics<parallel>], iteration_bounds = array<i64: 2>, scalar_prefetch = 0 : i64, scratch_operands = 1 : i64, tpu.core_type = #tpu.core_type<tc>, window_params = [{transform_indices = @transform_0, window_bounds = array<i64: 1, 32, 256>}, {pipeline_mode = #tpu.pipeline_mode<synchronous>, transform_indices = @transform_1, window_bounds = array<i64: 9, 256>}, {pipeline_mode = #tpu.pipeline_mode<synchronous>, transform_indices = @transform_2, window_bounds = array<i64: 8, 32>}, {pipeline_mode = #tpu.pipeline_mode<synchronous>, transform_indices = @transform_3, window_bounds = array<i64: 8, 1>}, {pipeline_mode = #tpu.pipeline_mode<synchronous>, transform_indices = @transform_4, window_bounds = array<i64: 8, 1>}, {pipeline_mode = #tpu.pipeline_mode<synchronous>, transform_indices = @transform_5, window_bounds = array<i64: 3, 2, 18>}, {pipeline_mode = #tpu.pipeline_mode<synchronous>, transform_indices = @transform_6, window_bounds = array<i64: 3, 2, 1>}, {pipeline_mode = #tpu.pipeline_mode<synchronous>, transform_indices = @transform_7, window_bounds = array<i64: 3, 2, 1>}, {pipeline_mode = #tpu.pipeline_mode<synchronous>, transform_indices = @transform_8, window_bounds = array<i64: 32, 8>}, {pipeline_mode = #tpu.pipeline_mode<synchronous>, transform_indices = @transform_9, window_bounds = array<i64: 32, 1>}, {pipeline_mode = #tpu.pipeline_mode<synchronous>, transform_indices = @transform_10, window_bounds = array<i64: 32, 1>}, {transform_indices = @transform_11, window_bounds = array<i64: 1, 32, 256>}]} {
    %c0 = arith.constant 0 : index
    %c0_0 = arith.constant 0 : index
    %c0_1 = arith.constant 0 : index
    %0 = vector.load %arg1[%c0, %c0_0, %c0_1] : memref<1x32x256xbf16, #tpu.memory_space<vmem>>, vector<1x32x256xbf16>
    %1 = vector.shape_cast %0 : vector<1x32x256xbf16> to vector<32x256xbf16>
    %c0_2 = arith.constant 0 : index
    %c0_3 = arith.constant 0 : index
    %2 = vector.load %arg3[%c0_2, %c0_3] : memref<8x32xbf16, #tpu.memory_space<vmem>>, vector<8x32xbf16>
    %cst = arith.constant dense<0.000000e+00> : vector<8x256xf32>
    %3 = tpu.matmul %2, %1, %cst {dimension_numbers = #tpu.dot_dimension_numbers<[1], [0], [0], [1], [0, 0, 1, 1], [], []>} : vector<8x32xbf16>, vector<32x256xbf16>, vector<8x256xf32> -> vector<8x256xf32>
    %c0_4 = arith.constant 0 : index
    %c0_5 = arith.constant 0 : index
    %4 = vector.load %arg4[%c0_4, %c0_5] : memref<8x1xf32, #tpu.memory_space<vmem>>, vector<8x1xf32>
    %5 = vector.broadcast %4 : vector<8x1xf32> to vector<8x256xf32>
    %6 = arith.mulf %3, %5 : vector<8x256xf32>
    %c0_6 = arith.constant 0 : index
    %c0_7 = arith.constant 0 : index
    %7 = vector.load %arg5[%c0_6, %c0_7] : memref<8x1xf32, #tpu.memory_space<vmem>>, vector<8x1xf32>
    %8 = vector.broadcast %7 : vector<8x1xf32> to vector<8x256xf32>
    %9 = arith.addf %6, %8 : vector<8x256xf32>
    %cst_8 = arith.constant 0.000000e+00 : f32
    %10 = vector.broadcast %cst_8 : f32 to vector<8x256xf32>
    %11 = arith.maximumf %9, %10 : vector<8x256xf32>
    %12 = arith.truncf %11 : vector<8x256xf32> to vector<8x256xbf16>
    %c0_9 = arith.constant 0 : index
    %c0_10 = arith.constant 0 : index
    %13 = vector.load %arg13[%c0_9, %c0_10] : memref<8x256xbf16, #tpu.memory_space<vmem>>, vector<8x256xbf16>
    tpu.vector_store %arg13[%c0_9, %c0_10], %12 {strides = array<i32>} : memref<8x256xbf16, #tpu.memory_space<vmem>>, vector<8x256xbf16>,
    %c0_11 = arith.constant 0 : index
    %c0_12 = arith.constant 0 : index
    %14 = vector.load %arg13[%c0_11, %c0_12] : memref<8x256xbf16, #tpu.memory_space<vmem>>, vector<2x256xbf16>
    %15 = arith.extf %14 : vector<2x256xbf16> to vector<2x256xf32>
    %c0_13 = arith.constant 0 : index
    %c0_14 = arith.constant 0 : index
    %c0_15 = arith.constant 0 : index
    %16 = vector.load %arg6[%c0_13, %c0_14, %c0_15] : memref<3x2x18xbf16, #tpu.memory_space<vmem>>, vector<1x2x18xbf16>
    %17 = vector.shape_cast %16 : vector<1x2x18xbf16> to vector<2x18xbf16>
    %cst_16 = arith.constant 0.000000e+00 : f32
    %18 = vector.broadcast %cst_16 : f32 to vector<2x256xf32>
    %c17_i32 = arith.constant 17 : i32
    %19 = tpu.dynamic_rotate %15 by %c17_i32 dim 1 : vector<2x256xf32>, i32 -> vector<2x256xf32>
    %c0_17 = arith.constant 0 : index
    %c0_18 = arith.constant 0 : index
    %20 = vector.load %arg2[%c0_17, %c0_18] : memref<9x256xf32, #tpu.memory_space<vmem>>, vector<1x256xf32>
    %21 = vector.broadcast %20 : vector<1x256xf32> to vector<2x256xf32>
    %22 = arith.mulf %19, %21 : vector<2x256xf32>
    %23 = vector.extract_strided_slice %17 {offsets = [0, 0], sizes = [2, 2], strides = [1, 1]} : vector<2x18xbf16> to vector<2x2xbf16>
    %24 = arith.truncf %22 : vector<2x256xf32> to vector<2x256xbf16>
    %cst_19 = arith.constant dense<0.000000e+00> : vector<2x256xf32>
    %25 = tpu.matmul %23, %24, %cst_19 {dimension_numbers = #tpu.dot_dimension_numbers<[1], [0], [0], [1], [0, 0, 1, 1], [], []>} : vector<2x2xbf16>, vector<2x256xbf16>, vector<2x256xf32> -> vector<2x256xf32>
    %26 = arith.addf %18, %25 : vector<2x256xf32>
    %c16_i32 = arith.constant 16 : i32
    %27 = tpu.dynamic_rotate %15 by %c16_i32 dim 1 : vector<2x256xf32>, i32 -> vector<2x256xf32>
    %c1 = arith.constant 1 : index
    %c0_20 = arith.constant 0 : index
    %28 = vector.load %arg2[%c1, %c0_20] : memref<9x256xf32, #tpu.memory_space<vmem>>, vector<1x256xf32>
    %29 = vector.broadcast %28 : vector<1x256xf32> to vector<2x256xf32>
    %30 = arith.mulf %27, %29 : vector<2x256xf32>
    %31 = vector.extract_strided_slice %17 {offsets = [0, 2], sizes = [2, 2], strides = [1, 1]} : vector<2x18xbf16> to vector<2x2xbf16>
    %32 = arith.truncf %30 : vector<2x256xf32> to vector<2x256xbf16>
    %cst_21 = arith.constant dense<0.000000e+00> : vector<2x256xf32>
    %33 = tpu.matmul %31, %32, %cst_21 {dimension_numbers = #tpu.dot_dimension_numbers<[1], [0], [0], [1], [0, 0, 1, 1], [], []>} : vector<2x2xbf16>, vector<2x256xbf16>, vector<2x256xf32> -> vector<2x256xf32>
    %34 = arith.addf %26, %33 : vector<2x256xf32>
    %c15_i32 = arith.constant 15 : i32
    %35 = tpu.dynamic_rotate %15 by %c15_i32 dim 1 : vector<2x256xf32>, i32 -> vector<2x256xf32>
    %c2 = arith.constant 2 : index
    %c0_22 = arith.constant 0 : index
    %36 = vector.load %arg2[%c2, %c0_22] : memref<9x256xf32, #tpu.memory_space<vmem>>, vector<1x256xf32>
    %37 = vector.broadcast %36 : vector<1x256xf32> to vector<2x256xf32>
    %38 = arith.mulf %35, %37 : vector<2x256xf32>
    %39 = vector.extract_strided_slice %17 {offsets = [0, 4], sizes = [2, 2], strides = [1, 1]} : vector<2x18xbf16> to vector<2x2xbf16>
    %40 = arith.truncf %38 : vector<2x256xf32> to vector<2x256xbf16>
    %cst_23 = arith.constant dense<0.000000e+00> : vector<2x256xf32>
    %41 = tpu.matmul %39, %40, %cst_23 {dimension_numbers = #tpu.dot_dimension_numbers<[1], [0], [0], [1], [0, 0, 1, 1], [], []>} : vector<2x2xbf16>, vector<2x256xbf16>, vector<2x256xf32> -> vector<2x256xf32>
    %42 = arith.addf %34, %41 : vector<2x256xf32>
    %c1_i32 = arith.constant 1 : i32
    %43 = tpu.dynamic_rotate %15 by %c1_i32 dim 1 : vector<2x256xf32>, i32 -> vector<2x256xf32>
    %c3 = arith.constant 3 : index
    %c0_24 = arith.constant 0 : index
    %44 = vector.load %arg2[%c3, %c0_24] : memref<9x256xf32, #tpu.memory_space<vmem>>, vector<1x256xf32>
    %45 = vector.broadcast %44 : vector<1x256xf32> to vector<2x256xf32>
    %46 = arith.mulf %43, %45 : vector<2x256xf32>
    %47 = vector.extract_strided_slice %17 {offsets = [0, 6], sizes = [2, 2], strides = [1, 1]} : vector<2x18xbf16> to vector<2x2xbf16>
    %48 = arith.truncf %46 : vector<2x256xf32> to vector<2x256xbf16>
    %cst_25 = arith.constant dense<0.000000e+00> : vector<2x256xf32>
    %49 = tpu.matmul %47, %48, %cst_25 {dimension_numbers = #tpu.dot_dimension_numbers<[1], [0], [0], [1], [0, 0, 1, 1], [], []>} : vector<2x2xbf16>, vector<2x256xbf16>, vector<2x256xf32> -> vector<2x256xf32>
    %50 = arith.addf %42, %49 : vector<2x256xf32>
    %51 = vector.extract_strided_slice %17 {offsets = [0, 8], sizes = [2, 2], strides = [1, 1]} : vector<2x18xbf16> to vector<2x2xbf16>
    %52 = arith.truncf %15 : vector<2x256xf32> to vector<2x256xbf16>
    %cst_26 = arith.constant dense<0.000000e+00> : vector<2x256xf32>
    %53 = tpu.matmul %51, %52, %cst_26 {dimension_numbers = #tpu.dot_dimension_numbers<[1], [0], [0], [1], [0, 0, 1, 1], [], []>} : vector<2x2xbf16>, vector<2x256xbf16>, vector<2x256xf32> -> vector<2x256xf32>
    %54 = arith.addf %50, %53 : vector<2x256xf32>
    %c255_i32 = arith.constant 255 : i32
    %55 = tpu.dynamic_rotate %15 by %c255_i32 dim 1 : vector<2x256xf32>, i32 -> vector<2x256xf32>
    %c5 = arith.constant 5 : index
    %c0_27 = arith.constant 0 : index
    %56 = vector.load %arg2[%c5, %c0_27] : memref<9x256xf32, #tpu.memory_space<vmem>>, vector<1x256xf32>
    %57 = vector.broadcast %56 : vector<1x256xf32> to vector<2x256xf32>
    %58 = arith.mulf %55, %57 : vector<2x256xf32>
    %59 = vector.extract_strided_slice %17 {offsets = [0, 10], sizes = [2, 2], strides = [1, 1]} : vector<2x18xbf16> to vector<2x2xbf16>
    %60 = arith.truncf %58 : vector<2x256xf32> to vector<2x256xbf16>
    %cst_28 = arith.constant dense<0.000000e+00> : vector<2x256xf32>
    %61 = tpu.matmul %59, %60, %cst_28 {dimension_numbers = #tpu.dot_dimension_numbers<[1], [0], [0], [1], [0, 0, 1, 1], [], []>} : vector<2x2xbf16>, vector<2x256xbf16>, vector<2x256xf32> -> vector<2x256xf32>
    %62 = arith.addf %54, %61 : vector<2x256xf32>
    %c241_i32 = arith.constant 241 : i32
    %63 = tpu.dynamic_rotate %15 by %c241_i32 dim 1 : vector<2x256xf32>, i32 -> vector<2x256xf32>
    %c6 = arith.constant 6 : index
    %c0_29 = arith.constant 0 : index
    %64 = vector.load %arg2[%c6, %c0_29] : memref<9x256xf32, #tpu.memory_space<vmem>>, vector<1x256xf32>
    %65 = vector.broadcast %64 : vector<1x256xf32> to vector<2x256xf32>
    %66 = arith.mulf %63, %65 : vector<2x256xf32>
    %67 = vector.extract_strided_slice %17 {offsets = [0, 12], sizes = [2, 2], strides = [1, 1]} : vector<2x18xbf16> to vector<2x2xbf16>
    %68 = arith.truncf %66 : vector<2x256xf32> to vector<2x256xbf16>
    %cst_30 = arith.constant dense<0.000000e+00> : vector<2x256xf32>
    %69 = tpu.matmul %67, %68, %cst_30 {dimension_numbers = #tpu.dot_dimension_numbers<[1], [0], [0], [1], [0, 0, 1, 1], [], []>} : vector<2x2xbf16>, vector<2x256xbf16>, vector<2x256xf32> -> vector<2x256xf32>
    %70 = arith.addf %62, %69 : vector<2x256xf32>
    %c240_i32 = arith.constant 240 : i32
    %71 = tpu.dynamic_rotate %15 by %c240_i32 dim 1 : vector<2x256xf32>, i32 -> vector<2x256xf32>
    %c7 = arith.constant 7 : index
    %c0_31 = arith.constant 0 : index
    %72 = vector.load %arg2[%c7, %c0_31] : memref<9x256xf32, #tpu.memory_space<vmem>>, vector<1x256xf32>
    %73 = vector.broadcast %72 : vector<1x256xf32> to vector<2x256xf32>
    %74 = arith.mulf %71, %73 : vector<2x256xf32>
    %75 = vector.extract_strided_slice %17 {offsets = [0, 14], sizes = [2, 2], strides = [1, 1]} : vector<2x18xbf16> to vector<2x2xbf16>
    %76 = arith.truncf %74 : vector<2x256xf32> to vector<2x256xbf16>
    %cst_32 = arith.constant dense<0.000000e+00> : vector<2x256xf32>
    %77 = tpu.matmul %75, %76, %cst_32 {dimension_numbers = #tpu.dot_dimension_numbers<[1], [0], [0], [1], [0, 0, 1, 1], [], []>} : vector<2x2xbf16>, vector<2x256xbf16>, vector<2x256xf32> -> vector<2x256xf32>
    %78 = arith.addf %70, %77 : vector<2x256xf32>
    %c239_i32 = arith.constant 239 : i32
    %79 = tpu.dynamic_rotate %15 by %c239_i32 dim 1 : vector<2x256xf32>, i32 -> vector<2x256xf32>
    %c8 = arith.constant 8 : index
    %c0_33 = arith.constant 0 : index
    %80 = vector.load %arg2[%c8, %c0_33] : memref<9x256xf32, #tpu.memory_space<vmem>>, vector<1x256xf32>
    %81 = vector.broadcast %80 : vector<1x256xf32> to vector<2x256xf32>
    %82 = arith.mulf %79, %81 : vector<2x256xf32>
    %83 = vector.extract_strided_slice %17 {offsets = [0, 16], sizes = [2, 2], strides = [1, 1]} : vector<2x18xbf16> to vector<2x2xbf16>
    %84 = arith.truncf %82 : vector<2x256xf32> to vector<2x256xbf16>
    %cst_34 = arith.constant dense<0.000000e+00> : vector<2x256xf32>
    %85 = tpu.matmul %83, %84, %cst_34 {dimension_numbers = #tpu.dot_dimension_numbers<[1], [0], [0], [1], [0, 0, 1, 1], [], []>} : vector<2x2xbf16>, vector<2x256xbf16>, vector<2x256xf32> -> vector<2x256xf32>
    %86 = arith.addf %78, %85 : vector<2x256xf32>
    %c0_35 = arith.constant 0 : index
    %c0_36 = arith.constant 0 : index
    %c0_37 = arith.constant 0 : index
    %87 = vector.load %arg7[%c0_35, %c0_36, %c0_37] : memref<3x2x1xf32, #tpu.memory_space<vmem>>, vector<1x2x1xf32>
    %88 = vector.shape_cast %87 : vector<1x2x1xf32> to vector<2x1xf32>
    %89 = vector.broadcast %88 : vector<2x1xf32> to vector<2x256xf32>
    %90 = arith.mulf %86, %89 : vector<2x256xf32>
    %c0_38 = arith.constant 0 : index
    %c0_39 = arith.constant 0 : index
    %c0_40 = arith.constant 0 : index
    %91 = vector.load %arg8[%c0_38, %c0_39, %c0_40] : memref<3x2x1xf32, #tpu.memory_space<vmem>>, vector<1x2x1xf32>
    %92 = vector.shape_cast %91 : vector<1x2x1xf32> to vector<2x1xf32>
    %93 = vector.broadcast %92 : vector<2x1xf32> to vector<2x256xf32>
    %94 = arith.addf %90, %93 : vector<2x256xf32>
    %cst_41 = arith.constant 0.000000e+00 : f32
    %95 = vector.broadcast %cst_41 : f32 to vector<2x256xf32>
    %96 = arith.maximumf %94, %95 : vector<2x256xf32>
    %97 = arith.truncf %96 : vector<2x256xf32> to vector<2x256xbf16>
    %c0_42 = arith.constant 0 : index
    %c0_43 = arith.constant 0 : index
    %98 = vector.load %arg13[%c0_42, %c0_43] : memref<8x256xbf16, #tpu.memory_space<vmem>>, vector<2x256xbf16>
    tpu.vector_store %arg13[%c0_42, %c0_43], %97 {strides = array<i32>} : memref<8x256xbf16, #tpu.memory_space<vmem>>, vector<2x256xbf16>,
    %c2_44 = arith.constant 2 : index
    %c0_45 = arith.constant 0 : index
    %99 = vector.load %arg13[%c2_44, %c0_45] : memref<8x256xbf16, #tpu.memory_space<vmem>>, vector<2x256xbf16>
    %100 = arith.extf %99 : vector<2x256xbf16> to vector<2x256xf32>
    %101 = arith.addf %96, %100 : vector<2x256xf32>
    %c1_46 = arith.constant 1 : index
    %c0_47 = arith.constant 0 : index
    %c0_48 = arith.constant 0 : index
    %102 = vector.load %arg6[%c1_46, %c0_47, %c0_48] : memref<3x2x18xbf16, #tpu.memory_space<vmem>>, vector<1x2x18xbf16>
    %103 = vector.shape_cast %102 : vector<1x2x18xbf16> to vector<2x18xbf16>
    %cst_49 = arith.constant 0.000000e+00 : f32
    %104 = vector.broadcast %cst_49 : f32 to vector<2x256xf32>
    %c17_i32_50 = arith.constant 17 : i32
    %105 = tpu.dynamic_rotate %101 by %c17_i32_50 dim 1 : vector<2x256xf32>, i32 -> vector<2x256xf32>
    %c0_51 = arith.constant 0 : index
    %c0_52 = arith.constant 0 : index
    %106 = vector.load %arg2[%c0_51, %c0_52] : memref<9x256xf32, #tpu.memory_space<vmem>>, vector<1x256xf32>
    %107 = vector.broadcast %106 : vector<1x256xf32> to vector<2x256xf32>
    %108 = arith.mulf %105, %107 : vector<2x256xf32>
    %109 = vector.extract_strided_slice %103 {offsets = [0, 0], sizes = [2, 2], strides = [1, 1]} : vector<2x18xbf16> to vector<2x2xbf16>
    %110 = arith.truncf %108 : vector<2x256xf32> to vector<2x256xbf16>
    %cst_53 = arith.constant dense<0.000000e+00> : vector<2x256xf32>
    %111 = tpu.matmul %109, %110, %cst_53 {dimension_numbers = #tpu.dot_dimension_numbers<[1], [0], [0], [1], [0, 0, 1, 1], [], []>} : vector<2x2xbf16>, vector<2x256xbf16>, vector<2x256xf32> -> vector<2x256xf32>
    %112 = arith.addf %104, %111 : vector<2x256xf32>
    %c16_i32_54 = arith.constant 16 : i32
    %113 = tpu.dynamic_rotate %101 by %c16_i32_54 dim 1 : vector<2x256xf32>, i32 -> vector<2x256xf32>
    %c1_55 = arith.constant 1 : index
    %c0_56 = arith.constant 0 : index
    %114 = vector.load %arg2[%c1_55, %c0_56] : memref<9x256xf32, #tpu.memory_space<vmem>>, vector<1x256xf32>
    %115 = vector.broadcast %114 : vector<1x256xf32> to vector<2x256xf32>
    %116 = arith.mulf %113, %115 : vector<2x256xf32>
    %117 = vector.extract_strided_slice %103 {offsets = [0, 2], sizes = [2, 2], strides = [1, 1]} : vector<2x18xbf16> to vector<2x2xbf16>
    %118 = arith.truncf %116 : vector<2x256xf32> to vector<2x256xbf16>
    %cst_57 = arith.constant dense<0.000000e+00> : vector<2x256xf32>
    %119 = tpu.matmul %117, %118, %cst_57 {dimension_numbers = #tpu.dot_dimension_numbers<[1], [0], [0], [1], [0, 0, 1, 1], [], []>} : vector<2x2xbf16>, vector<2x256xbf16>, vector<2x256xf32> -> vector<2x256xf32>
    %120 = arith.addf %112, %119 : vector<2x256xf32>
    %c15_i32_58 = arith.constant 15 : i32
    %121 = tpu.dynamic_rotate %101 by %c15_i32_58 dim 1 : vector<2x256xf32>, i32 -> vector<2x256xf32>
    %c2_59 = arith.constant 2 : index
    %c0_60 = arith.constant 0 : index
    %122 = vector.load %arg2[%c2_59, %c0_60] : memref<9x256xf32, #tpu.memory_space<vmem>>, vector<1x256xf32>
    %123 = vector.broadcast %122 : vector<1x256xf32> to vector<2x256xf32>
    %124 = arith.mulf %121, %123 : vector<2x256xf32>
    %125 = vector.extract_strided_slice %103 {offsets = [0, 4], sizes = [2, 2], strides = [1, 1]} : vector<2x18xbf16> to vector<2x2xbf16>
    %126 = arith.truncf %124 : vector<2x256xf32> to vector<2x256xbf16>
    %cst_61 = arith.constant dense<0.000000e+00> : vector<2x256xf32>
    %127 = tpu.matmul %125, %126, %cst_61 {dimension_numbers = #tpu.dot_dimension_numbers<[1], [0], [0], [1], [0, 0, 1, 1], [], []>} : vector<2x2xbf16>, vector<2x256xbf16>, vector<2x256xf32> -> vector<2x256xf32>
    %128 = arith.addf %120, %127 : vector<2x256xf32>
    %c1_i32_62 = arith.constant 1 : i32
    %129 = tpu.dynamic_rotate %101 by %c1_i32_62 dim 1 : vector<2x256xf32>, i32 -> vector<2x256xf32>
    %c3_63 = arith.constant 3 : index
    %c0_64 = arith.constant 0 : index
    %130 = vector.load %arg2[%c3_63, %c0_64] : memref<9x256xf32, #tpu.memory_space<vmem>>, vector<1x256xf32>
    %131 = vector.broadcast %130 : vector<1x256xf32> to vector<2x256xf32>
    %132 = arith.mulf %129, %131 : vector<2x256xf32>
    %133 = vector.extract_strided_slice %103 {offsets = [0, 6], sizes = [2, 2], strides = [1, 1]} : vector<2x18xbf16> to vector<2x2xbf16>
    %134 = arith.truncf %132 : vector<2x256xf32> to vector<2x256xbf16>
    %cst_65 = arith.constant dense<0.000000e+00> : vector<2x256xf32>
    %135 = tpu.matmul %133, %134, %cst_65 {dimension_numbers = #tpu.dot_dimension_numbers<[1], [0], [0], [1], [0, 0, 1, 1], [], []>} : vector<2x2xbf16>, vector<2x256xbf16>, vector<2x256xf32> -> vector<2x256xf32>
    %136 = arith.addf %128, %135 : vector<2x256xf32>
    %137 = vector.extract_strided_slice %103 {offsets = [0, 8], sizes = [2, 2], strides = [1, 1]} : vector<2x18xbf16> to vector<2x2xbf16>
    %138 = arith.truncf %101 : vector<2x256xf32> to vector<2x256xbf16>
    %cst_66 = arith.constant dense<0.000000e+00> : vector<2x256xf32>
    %139 = tpu.matmul %137, %138, %cst_66 {dimension_numbers = #tpu.dot_dimension_numbers<[1], [0], [0], [1], [0, 0, 1, 1], [], []>} : vector<2x2xbf16>, vector<2x256xbf16>, vector<2x256xf32> -> vector<2x256xf32>
    %140 = arith.addf %136, %139 : vector<2x256xf32>
    %c255_i32_67 = arith.constant 255 : i32
    %141 = tpu.dynamic_rotate %101 by %c255_i32_67 dim 1 : vector<2x256xf32>, i32 -> vector<2x256xf32>
    %c5_68 = arith.constant 5 : index
    %c0_69 = arith.constant 0 : index
    %142 = vector.load %arg2[%c5_68, %c0_69] : memref<9x256xf32, #tpu.memory_space<vmem>>, vector<1x256xf32>
    %143 = vector.broadcast %142 : vector<1x256xf32> to vector<2x256xf32>
    %144 = arith.mulf %141, %143 : vector<2x256xf32>
    %145 = vector.extract_strided_slice %103 {offsets = [0, 10], sizes = [2, 2], strides = [1, 1]} : vector<2x18xbf16> to vector<2x2xbf16>
    %146 = arith.truncf %144 : vector<2x256xf32> to vector<2x256xbf16>
    %cst_70 = arith.constant dense<0.000000e+00> : vector<2x256xf32>
    %147 = tpu.matmul %145, %146, %cst_70 {dimension_numbers = #tpu.dot_dimension_numbers<[1], [0], [0], [1], [0, 0, 1, 1], [], []>} : vector<2x2xbf16>, vector<2x256xbf16>, vector<2x256xf32> -> vector<2x256xf32>
    %148 = arith.addf %140, %147 : vector<2x256xf32>
    %c241_i32_71 = arith.constant 241 : i32
    %149 = tpu.dynamic_rotate %101 by %c241_i32_71 dim 1 : vector<2x256xf32>, i32 -> vector<2x256xf32>
    %c6_72 = arith.constant 6 : index
    %c0_73 = arith.constant 0 : index
    %150 = vector.load %arg2[%c6_72, %c0_73] : memref<9x256xf32, #tpu.memory_space<vmem>>, vector<1x256xf32>
    %151 = vector.broadcast %150 : vector<1x256xf32> to vector<2x256xf32>
    %152 = arith.mulf %149, %151 : vector<2x256xf32>
    %153 = vector.extract_strided_slice %103 {offsets = [0, 12], sizes = [2, 2], strides = [1, 1]} : vector<2x18xbf16> to vector<2x2xbf16>
    %154 = arith.truncf %152 : vector<2x256xf32> to vector<2x256xbf16>
    %cst_74 = arith.constant dense<0.000000e+00> : vector<2x256xf32>
    %155 = tpu.matmul %153, %154, %cst_74 {dimension_numbers = #tpu.dot_dimension_numbers<[1], [0], [0], [1], [0, 0, 1, 1], [], []>} : vector<2x2xbf16>, vector<2x256xbf16>, vector<2x256xf32> -> vector<2x256xf32>
    %156 = arith.addf %148, %155 : vector<2x256xf32>
    %c240_i32_75 = arith.constant 240 : i32
    %157 = tpu.dynamic_rotate %101 by %c240_i32_75 dim 1 : vector<2x256xf32>, i32 -> vector<2x256xf32>
    %c7_76 = arith.constant 7 : index
    %c0_77 = arith.constant 0 : index
    %158 = vector.load %arg2[%c7_76, %c0_77] : memref<9x256xf32, #tpu.memory_space<vmem>>, vector<1x256xf32>
    %159 = vector.broadcast %158 : vector<1x256xf32> to vector<2x256xf32>
    %160 = arith.mulf %157, %159 : vector<2x256xf32>
    %161 = vector.extract_strided_slice %103 {offsets = [0, 14], sizes = [2, 2], strides = [1, 1]} : vector<2x18xbf16> to vector<2x2xbf16>
    %162 = arith.truncf %160 : vector<2x256xf32> to vector<2x256xbf16>
    %cst_78 = arith.constant dense<0.000000e+00> : vector<2x256xf32>
    %163 = tpu.matmul %161, %162, %cst_78 {dimension_numbers = #tpu.dot_dimension_numbers<[1], [0], [0], [1], [0, 0, 1, 1], [], []>} : vector<2x2xbf16>, vector<2x256xbf16>, vector<2x256xf32> -> vector<2x256xf32>
    %164 = arith.addf %156, %163 : vector<2x256xf32>
    %c239_i32_79 = arith.constant 239 : i32
    %165 = tpu.dynamic_rotate %101 by %c239_i32_79 dim 1 : vector<2x256xf32>, i32 -> vector<2x256xf32>
    %c8_80 = arith.constant 8 : index
    %c0_81 = arith.constant 0 : index
    %166 = vector.load %arg2[%c8_80, %c0_81] : memref<9x256xf32, #tpu.memory_space<vmem>>, vector<1x256xf32>
    %167 = vector.broadcast %166 : vector<1x256xf32> to vector<2x256xf32>
    %168 = arith.mulf %165, %167 : vector<2x256xf32>
    %169 = vector.extract_strided_slice %103 {offsets = [0, 16], sizes = [2, 2], strides = [1, 1]} : vector<2x18xbf16> to vector<2x2xbf16>
    %170 = arith.truncf %168 : vector<2x256xf32> to vector<2x256xbf16>
    %cst_82 = arith.constant dense<0.000000e+00> : vector<2x256xf32>
    %171 = tpu.matmul %169, %170, %cst_82 {dimension_numbers = #tpu.dot_dimension_numbers<[1], [0], [0], [1], [0, 0, 1, 1], [], []>} : vector<2x2xbf16>, vector<2x256xbf16>, vector<2x256xf32> -> vector<2x256xf32>
    %172 = arith.addf %164, %171 : vector<2x256xf32>
    %c1_83 = arith.constant 1 : index
    %c0_84 = arith.constant 0 : index
    %c0_85 = arith.constant 0 : index
    %173 = vector.load %arg7[%c1_83, %c0_84, %c0_85] : memref<3x2x1xf32, #tpu.memory_space<vmem>>, vector<1x2x1xf32>
    %174 = vector.shape_cast %173 : vector<1x2x1xf32> to vector<2x1xf32>
    %175 = vector.broadcast %174 : vector<2x1xf32> to vector<2x256xf32>
    %176 = arith.mulf %172, %175 : vector<2x256xf32>
    %c1_86 = arith.constant 1 : index
    %c0_87 = arith.constant 0 : index
    %c0_88 = arith.constant 0 : index
    %177 = vector.load %arg8[%c1_86, %c0_87, %c0_88] : memref<3x2x1xf32, #tpu.memory_space<vmem>>, vector<1x2x1xf32>
    %178 = vector.shape_cast %177 : vector<1x2x1xf32> to vector<2x1xf32>
    %179 = vector.broadcast %178 : vector<2x1xf32> to vector<2x256xf32>
    %180 = arith.addf %176, %179 : vector<2x256xf32>
    %cst_89 = arith.constant 0.000000e+00 : f32
    %181 = vector.broadcast %cst_89 : f32 to vector<2x256xf32>
    %182 = arith.maximumf %180, %181 : vector<2x256xf32>
    %183 = arith.truncf %182 : vector<2x256xf32> to vector<2x256xbf16>
    %c2_90 = arith.constant 2 : index
    %c0_91 = arith.constant 0 : index
    %184 = vector.load %arg13[%c2_90, %c0_91] : memref<8x256xbf16, #tpu.memory_space<vmem>>, vector<2x256xbf16>
    tpu.vector_store %arg13[%c2_90, %c0_91], %183 {strides = array<i32>} : memref<8x256xbf16, #tpu.memory_space<vmem>>, vector<2x256xbf16>,
    %c4 = arith.constant 4 : index
    %c0_92 = arith.constant 0 : index
    %185 = vector.load %arg13[%c4, %c0_92] : memref<8x256xbf16, #tpu.memory_space<vmem>>, vector<2x256xbf16>
    %186 = arith.extf %185 : vector<2x256xbf16> to vector<2x256xf32>
    %187 = arith.addf %182, %186 : vector<2x256xf32>
    %c2_93 = arith.constant 2 : index
    %c0_94 = arith.constant 0 : index
    %c0_95 = arith.constant 0 : index
    %188 = vector.load %arg6[%c2_93, %c0_94, %c0_95] : memref<3x2x18xbf16, #tpu.memory_space<vmem>>, vector<1x2x18xbf16>
    %189 = vector.shape_cast %188 : vector<1x2x18xbf16> to vector<2x18xbf16>
    %cst_96 = arith.constant 0.000000e+00 : f32
    %190 = vector.broadcast %cst_96 : f32 to vector<2x256xf32>
    %c17_i32_97 = arith.constant 17 : i32
    %191 = tpu.dynamic_rotate %187 by %c17_i32_97 dim 1 : vector<2x256xf32>, i32 -> vector<2x256xf32>
    %c0_98 = arith.constant 0 : index
    %c0_99 = arith.constant 0 : index
    %192 = vector.load %arg2[%c0_98, %c0_99] : memref<9x256xf32, #tpu.memory_space<vmem>>, vector<1x256xf32>
    %193 = vector.broadcast %192 : vector<1x256xf32> to vector<2x256xf32>
    %194 = arith.mulf %191, %193 : vector<2x256xf32>
    %195 = vector.extract_strided_slice %189 {offsets = [0, 0], sizes = [2, 2], strides = [1, 1]} : vector<2x18xbf16> to vector<2x2xbf16>
    %196 = arith.truncf %194 : vector<2x256xf32> to vector<2x256xbf16>
    %cst_100 = arith.constant dense<0.000000e+00> : vector<2x256xf32>
    %197 = tpu.matmul %195, %196, %cst_100 {dimension_numbers = #tpu.dot_dimension_numbers<[1], [0], [0], [1], [0, 0, 1, 1], [], []>} : vector<2x2xbf16>, vector<2x256xbf16>, vector<2x256xf32> -> vector<2x256xf32>
    %198 = arith.addf %190, %197 : vector<2x256xf32>
    %c16_i32_101 = arith.constant 16 : i32
    %199 = tpu.dynamic_rotate %187 by %c16_i32_101 dim 1 : vector<2x256xf32>, i32 -> vector<2x256xf32>
    %c1_102 = arith.constant 1 : index
    %c0_103 = arith.constant 0 : index
    %200 = vector.load %arg2[%c1_102, %c0_103] : memref<9x256xf32, #tpu.memory_space<vmem>>, vector<1x256xf32>
    %201 = vector.broadcast %200 : vector<1x256xf32> to vector<2x256xf32>
    %202 = arith.mulf %199, %201 : vector<2x256xf32>
    %203 = vector.extract_strided_slice %189 {offsets = [0, 2], sizes = [2, 2], strides = [1, 1]} : vector<2x18xbf16> to vector<2x2xbf16>
    %204 = arith.truncf %202 : vector<2x256xf32> to vector<2x256xbf16>
    %cst_104 = arith.constant dense<0.000000e+00> : vector<2x256xf32>
    %205 = tpu.matmul %203, %204, %cst_104 {dimension_numbers = #tpu.dot_dimension_numbers<[1], [0], [0], [1], [0, 0, 1, 1], [], []>} : vector<2x2xbf16>, vector<2x256xbf16>, vector<2x256xf32> -> vector<2x256xf32>
    %206 = arith.addf %198, %205 : vector<2x256xf32>
    %c15_i32_105 = arith.constant 15 : i32
    %207 = tpu.dynamic_rotate %187 by %c15_i32_105 dim 1 : vector<2x256xf32>, i32 -> vector<2x256xf32>
    %c2_106 = arith.constant 2 : index
    %c0_107 = arith.constant 0 : index
    %208 = vector.load %arg2[%c2_106, %c0_107] : memref<9x256xf32, #tpu.memory_space<vmem>>, vector<1x256xf32>
    %209 = vector.broadcast %208 : vector<1x256xf32> to vector<2x256xf32>
    %210 = arith.mulf %207, %209 : vector<2x256xf32>
    %211 = vector.extract_strided_slice %189 {offsets = [0, 4], sizes = [2, 2], strides = [1, 1]} : vector<2x18xbf16> to vector<2x2xbf16>
    %212 = arith.truncf %210 : vector<2x256xf32> to vector<2x256xbf16>
    %cst_108 = arith.constant dense<0.000000e+00> : vector<2x256xf32>
    %213 = tpu.matmul %211, %212, %cst_108 {dimension_numbers = #tpu.dot_dimension_numbers<[1], [0], [0], [1], [0, 0, 1, 1], [], []>} : vector<2x2xbf16>, vector<2x256xbf16>, vector<2x256xf32> -> vector<2x256xf32>
    %214 = arith.addf %206, %213 : vector<2x256xf32>
    %c1_i32_109 = arith.constant 1 : i32
    %215 = tpu.dynamic_rotate %187 by %c1_i32_109 dim 1 : vector<2x256xf32>, i32 -> vector<2x256xf32>
    %c3_110 = arith.constant 3 : index
    %c0_111 = arith.constant 0 : index
    %216 = vector.load %arg2[%c3_110, %c0_111] : memref<9x256xf32, #tpu.memory_space<vmem>>, vector<1x256xf32>
    %217 = vector.broadcast %216 : vector<1x256xf32> to vector<2x256xf32>
    %218 = arith.mulf %215, %217 : vector<2x256xf32>
    %219 = vector.extract_strided_slice %189 {offsets = [0, 6], sizes = [2, 2], strides = [1, 1]} : vector<2x18xbf16> to vector<2x2xbf16>
    %220 = arith.truncf %218 : vector<2x256xf32> to vector<2x256xbf16>
    %cst_112 = arith.constant dense<0.000000e+00> : vector<2x256xf32>
    %221 = tpu.matmul %219, %220, %cst_112 {dimension_numbers = #tpu.dot_dimension_numbers<[1], [0], [0], [1], [0, 0, 1, 1], [], []>} : vector<2x2xbf16>, vector<2x256xbf16>, vector<2x256xf32> -> vector<2x256xf32>
    %222 = arith.addf %214, %221 : vector<2x256xf32>
    %223 = vector.extract_strided_slice %189 {offsets = [0, 8], sizes = [2, 2], strides = [1, 1]} : vector<2x18xbf16> to vector<2x2xbf16>
    %224 = arith.truncf %187 : vector<2x256xf32> to vector<2x256xbf16>
    %cst_113 = arith.constant dense<0.000000e+00> : vector<2x256xf32>
    %225 = tpu.matmul %223, %224, %cst_113 {dimension_numbers = #tpu.dot_dimension_numbers<[1], [0], [0], [1], [0, 0, 1, 1], [], []>} : vector<2x2xbf16>, vector<2x256xbf16>, vector<2x256xf32> -> vector<2x256xf32>
    %226 = arith.addf %222, %225 : vector<2x256xf32>
    %c255_i32_114 = arith.constant 255 : i32
    %227 = tpu.dynamic_rotate %187 by %c255_i32_114 dim 1 : vector<2x256xf32>, i32 -> vector<2x256xf32>
    %c5_115 = arith.constant 5 : index
    %c0_116 = arith.constant 0 : index
    %228 = vector.load %arg2[%c5_115, %c0_116] : memref<9x256xf32, #tpu.memory_space<vmem>>, vector<1x256xf32>
    %229 = vector.broadcast %228 : vector<1x256xf32> to vector<2x256xf32>
    %230 = arith.mulf %227, %229 : vector<2x256xf32>
    %231 = vector.extract_strided_slice %189 {offsets = [0, 10], sizes = [2, 2], strides = [1, 1]} : vector<2x18xbf16> to vector<2x2xbf16>
    %232 = arith.truncf %230 : vector<2x256xf32> to vector<2x256xbf16>
    %cst_117 = arith.constant dense<0.000000e+00> : vector<2x256xf32>
    %233 = tpu.matmul %231, %232, %cst_117 {dimension_numbers = #tpu.dot_dimension_numbers<[1], [0], [0], [1], [0, 0, 1, 1], [], []>} : vector<2x2xbf16>, vector<2x256xbf16>, vector<2x256xf32> -> vector<2x256xf32>
    %234 = arith.addf %226, %233 : vector<2x256xf32>
    %c241_i32_118 = arith.constant 241 : i32
    %235 = tpu.dynamic_rotate %187 by %c241_i32_118 dim 1 : vector<2x256xf32>, i32 -> vector<2x256xf32>
    %c6_119 = arith.constant 6 : index
    %c0_120 = arith.constant 0 : index
    %236 = vector.load %arg2[%c6_119, %c0_120] : memref<9x256xf32, #tpu.memory_space<vmem>>, vector<1x256xf32>
    %237 = vector.broadcast %236 : vector<1x256xf32> to vector<2x256xf32>
    %238 = arith.mulf %235, %237 : vector<2x256xf32>
    %239 = vector.extract_strided_slice %189 {offsets = [0, 12], sizes = [2, 2], strides = [1, 1]} : vector<2x18xbf16> to vector<2x2xbf16>
    %240 = arith.truncf %238 : vector<2x256xf32> to vector<2x256xbf16>
    %cst_121 = arith.constant dense<0.000000e+00> : vector<2x256xf32>
    %241 = tpu.matmul %239, %240, %cst_121 {dimension_numbers = #tpu.dot_dimension_numbers<[1], [0], [0], [1], [0, 0, 1, 1], [], []>} : vector<2x2xbf16>, vector<2x256xbf16>, vector<2x256xf32> -> vector<2x256xf32>
    %242 = arith.addf %234, %241 : vector<2x256xf32>
    %c240_i32_122 = arith.constant 240 : i32
    %243 = tpu.dynamic_rotate %187 by %c240_i32_122 dim 1 : vector<2x256xf32>, i32 -> vector<2x256xf32>
    %c7_123 = arith.constant 7 : index
    %c0_124 = arith.constant 0 : index
    %244 = vector.load %arg2[%c7_123, %c0_124] : memref<9x256xf32, #tpu.memory_space<vmem>>, vector<1x256xf32>
    %245 = vector.broadcast %244 : vector<1x256xf32> to vector<2x256xf32>
    %246 = arith.mulf %243, %245 : vector<2x256xf32>
    %247 = vector.extract_strided_slice %189 {offsets = [0, 14], sizes = [2, 2], strides = [1, 1]} : vector<2x18xbf16> to vector<2x2xbf16>
    %248 = arith.truncf %246 : vector<2x256xf32> to vector<2x256xbf16>
    %cst_125 = arith.constant dense<0.000000e+00> : vector<2x256xf32>
    %249 = tpu.matmul %247, %248, %cst_125 {dimension_numbers = #tpu.dot_dimension_numbers<[1], [0], [0], [1], [0, 0, 1, 1], [], []>} : vector<2x2xbf16>, vector<2x256xbf16>, vector<2x256xf32> -> vector<2x256xf32>
    %250 = arith.addf %242, %249 : vector<2x256xf32>
    %c239_i32_126 = arith.constant 239 : i32
    %251 = tpu.dynamic_rotate %187 by %c239_i32_126 dim 1 : vector<2x256xf32>, i32 -> vector<2x256xf32>
    %c8_127 = arith.constant 8 : index
    %c0_128 = arith.constant 0 : index
    %252 = vector.load %arg2[%c8_127, %c0_128] : memref<9x256xf32, #tpu.memory_space<vmem>>, vector<1x256xf32>
    %253 = vector.broadcast %252 : vector<1x256xf32> to vector<2x256xf32>
    %254 = arith.mulf %251, %253 : vector<2x256xf32>
    %255 = vector.extract_strided_slice %189 {offsets = [0, 16], sizes = [2, 2], strides = [1, 1]} : vector<2x18xbf16> to vector<2x2xbf16>
    %256 = arith.truncf %254 : vector<2x256xf32> to vector<2x256xbf16>
    %cst_129 = arith.constant dense<0.000000e+00> : vector<2x256xf32>
    %257 = tpu.matmul %255, %256, %cst_129 {dimension_numbers = #tpu.dot_dimension_numbers<[1], [0], [0], [1], [0, 0, 1, 1], [], []>} : vector<2x2xbf16>, vector<2x256xbf16>, vector<2x256xf32> -> vector<2x256xf32>
    %258 = arith.addf %250, %257 : vector<2x256xf32>
    %c2_130 = arith.constant 2 : index
    %c0_131 = arith.constant 0 : index
    %c0_132 = arith.constant 0 : index
    %259 = vector.load %arg7[%c2_130, %c0_131, %c0_132] : memref<3x2x1xf32, #tpu.memory_space<vmem>>, vector<1x2x1xf32>
    %260 = vector.shape_cast %259 : vector<1x2x1xf32> to vector<2x1xf32>
    %261 = vector.broadcast %260 : vector<2x1xf32> to vector<2x256xf32>
    %262 = arith.mulf %258, %261 : vector<2x256xf32>
    %c2_133 = arith.constant 2 : index
    %c0_134 = arith.constant 0 : index
    %c0_135 = arith.constant 0 : index
    %263 = vector.load %arg8[%c2_133, %c0_134, %c0_135] : memref<3x2x1xf32, #tpu.memory_space<vmem>>, vector<1x2x1xf32>
    %264 = vector.shape_cast %263 : vector<1x2x1xf32> to vector<2x1xf32>
    %265 = vector.broadcast %264 : vector<2x1xf32> to vector<2x256xf32>
    %266 = arith.addf %262, %265 : vector<2x256xf32>
    %cst_136 = arith.constant 0.000000e+00 : f32
    %267 = vector.broadcast %cst_136 : f32 to vector<2x256xf32>
    %268 = arith.maximumf %266, %267 : vector<2x256xf32>
    %269 = arith.truncf %268 : vector<2x256xf32> to vector<2x256xbf16>
    %c4_137 = arith.constant 4 : index
    %c0_138 = arith.constant 0 : index
    %270 = vector.load %arg13[%c4_137, %c0_138] : memref<8x256xbf16, #tpu.memory_space<vmem>>, vector<2x256xbf16>
    tpu.vector_store %arg13[%c4_137, %c0_138], %269 {strides = array<i32>} : memref<8x256xbf16, #tpu.memory_space<vmem>>, vector<2x256xbf16>,
    %c0_139 = arith.constant 0 : index
    %c0_140 = arith.constant 0 : index
    %271 = vector.load %arg9[%c0_139, %c0_140] : memref<32x8xbf16, #tpu.memory_space<vmem>>, vector<32x8xbf16>
    %c0_141 = arith.constant 0 : index
    %c0_142 = arith.constant 0 : index
    %272 = vector.load %arg13[%c0_141, %c0_142] : memref<8x256xbf16, #tpu.memory_space<vmem>>, vector<8x256xbf16>
    %cst_143 = arith.constant dense<0.000000e+00> : vector<32x256xf32>
    %273 = tpu.matmul %271, %272, %cst_143 {dimension_numbers = #tpu.dot_dimension_numbers<[1], [0], [0], [1], [0, 0, 1, 1], [], []>} : vector<32x8xbf16>, vector<8x256xbf16>, vector<32x256xf32> -> vector<32x256xf32>
    %c0_144 = arith.constant 0 : index
    %c0_145 = arith.constant 0 : index
    %274 = vector.load %arg10[%c0_144, %c0_145] : memref<32x1xf32, #tpu.memory_space<vmem>>, vector<32x1xf32>
    %275 = vector.broadcast %274 : vector<32x1xf32> to vector<32x256xf32>
    %276 = arith.mulf %273, %275 : vector<32x256xf32>
    %c0_146 = arith.constant 0 : index
    %c0_147 = arith.constant 0 : index
    %277 = vector.load %arg11[%c0_146, %c0_147] : memref<32x1xf32, #tpu.memory_space<vmem>>, vector<32x1xf32>
    %278 = vector.broadcast %277 : vector<32x1xf32> to vector<32x256xf32>
    %279 = arith.addf %276, %278 : vector<32x256xf32>
    %280 = arith.extf %1 : vector<32x256xbf16> to vector<32x256xf32>
    %281 = arith.addf %279, %280 : vector<32x256xf32>
    %cst_148 = arith.constant 0.000000e+00 : f32
    %282 = vector.broadcast %cst_148 : f32 to vector<32x256xf32>
    %283 = arith.maximumf %281, %282 : vector<32x256xf32>
    %284 = arith.truncf %283 : vector<32x256xf32> to vector<32x256xbf16>
    %c0_149 = arith.constant 0 : index
    %c0_150 = arith.constant 0 : index
    %c0_151 = arith.constant 0 : index
    %285 = vector.load %arg12[%c0_149, %c0_150, %c0_151] : memref<1x32x256xbf16, #tpu.memory_space<vmem>>, vector<1x32x256xbf16>
    %286 = vector.shape_cast %285 : vector<1x32x256xbf16> to vector<32x256xbf16>
    %287 = vector.shape_cast %284 : vector<32x256xbf16> to vector<1x32x256xbf16>
    tpu.vector_store %arg12[%c0_149, %c0_150, %c0_151], %287 {strides = array<i32>} : memref<1x32x256xbf16, #tpu.memory_space<vmem>>, vector<1x32x256xbf16>,
    return
  }
  func.func @transform_0(%arg0: i32) -> (i32, i32, i32) {
    %c0_i32 = arith.constant 0 : i32
    %c0_i32_0 = arith.constant 0 : i32
    %c0_i32_1 = arith.constant 0 : i32
    return %arg0, %c0_i32, %c0_i32_0 : i32, i32, i32
  }
  func.func @transform_1(%arg0: i32) -> (i32, i32) {
    %c0_i32 = arith.constant 0 : i32
    %c0_i32_0 = arith.constant 0 : i32
    %c0_i32_1 = arith.constant 0 : i32
    return %c0_i32, %c0_i32_0 : i32, i32
  }
  func.func @transform_2(%arg0: i32) -> (i32, i32) {
    %c0_i32 = arith.constant 0 : i32
    %c0_i32_0 = arith.constant 0 : i32
    %c0_i32_1 = arith.constant 0 : i32
    return %c0_i32, %c0_i32_0 : i32, i32
  }
  func.func @transform_3(%arg0: i32) -> (i32, i32) {
    %c0_i32 = arith.constant 0 : i32
    %c0_i32_0 = arith.constant 0 : i32
    %c0_i32_1 = arith.constant 0 : i32
    return %c0_i32, %c0_i32_0 : i32, i32
  }
  func.func @transform_4(%arg0: i32) -> (i32, i32) {
    %c0_i32 = arith.constant 0 : i32
    %c0_i32_0 = arith.constant 0 : i32
    %c0_i32_1 = arith.constant 0 : i32
    return %c0_i32, %c0_i32_0 : i32, i32
  }
  func.func @transform_5(%arg0: i32) -> (i32, i32, i32) {
    %c0_i32 = arith.constant 0 : i32
    %c0_i32_0 = arith.constant 0 : i32
    %c0_i32_1 = arith.constant 0 : i32
    %c0_i32_2 = arith.constant 0 : i32
    return %c0_i32, %c0_i32_0, %c0_i32_1 : i32, i32, i32
  }
  func.func @transform_6(%arg0: i32) -> (i32, i32, i32) {
    %c0_i32 = arith.constant 0 : i32
    %c0_i32_0 = arith.constant 0 : i32
    %c0_i32_1 = arith.constant 0 : i32
    %c0_i32_2 = arith.constant 0 : i32
    return %c0_i32, %c0_i32_0, %c0_i32_1 : i32, i32, i32
  }
  func.func @transform_7(%arg0: i32) -> (i32, i32, i32) {
    %c0_i32 = arith.constant 0 : i32
    %c0_i32_0 = arith.constant 0 : i32
    %c0_i32_1 = arith.constant 0 : i32
    %c0_i32_2 = arith.constant 0 : i32
    return %c0_i32, %c0_i32_0, %c0_i32_1 : i32, i32, i32
  }
  func.func @transform_8(%arg0: i32) -> (i32, i32) {
    %c0_i32 = arith.constant 0 : i32
    %c0_i32_0 = arith.constant 0 : i32
    %c0_i32_1 = arith.constant 0 : i32
    return %c0_i32, %c0_i32_0 : i32, i32
  }
  func.func @transform_9(%arg0: i32) -> (i32, i32) {
    %c0_i32 = arith.constant 0 : i32
    %c0_i32_0 = arith.constant 0 : i32
    %c0_i32_1 = arith.constant 0 : i32
    return %c0_i32, %c0_i32_0 : i32, i32
  }
  func.func @transform_10(%arg0: i32) -> (i32, i32) {
    %c0_i32 = arith.constant 0 : i32
    %c0_i32_0 = arith.constant 0 : i32
    %c0_i32_1 = arith.constant 0 : i32
    return %c0_i32, %c0_i32_0 : i32, i32
  }
  func.func @transform_11(%arg0: i32) -> (i32, i32, i32) {
    %c0_i32 = arith.constant 0 : i32
    %c0_i32_0 = arith.constant 0 : i32
    %c0_i32_1 = arith.constant 0 : i32
    return %arg0, %c0_i32, %c0_i32_0 : i32, i32, i32
  }
}

</mosaic_0001>

<llo_original>
// kernel: bottle2neck_forward.1
$region0: #{bottle2neck_forward.1}
  #allocation0 [shape = 'u32[]', space=smem, size = 0x4, offset = 0x4, fixed_abs, tag = 'smem constant byte address 0x4 - core index']
  #allocation1 [shape = 'u32[72,128]{1,0:T(1,128)}', space=vmem, size = 0x9000, scoped, tag = 'internal scratch']
  #allocation2 [shape = 'bf16[8,256]{1,0:T(8,128)(2,1)}', space=vmem, size = 0x1000, scoped, tag = 'scratch operand']
  %s0 = inlined_call_operand.vmem [shape: bf16[2,32,256], index: 0, kind: input, shape index: {}]
  %s1 = inlined_call_operand.vmem [shape: f32[9,256], index: 1, kind: input, shape index: {}]
  %s2 = inlined_call_operand.vmem [shape: bf16[8,32], index: 2, kind: input, shape index: {}]
  %s3 = inlined_call_operand.vmem [shape: f32[8,1], index: 3, kind: input, shape index: {}]
  %s4 = inlined_call_operand.vmem [shape: f32[8,1], index: 4, kind: input, shape index: {}]
  %s5 = inlined_call_operand.vmem [shape: bf16[3,2,18], index: 5, kind: input, shape index: {}]
  %s6 = inlined_call_operand.vmem [shape: f32[3,2,1], index: 6, kind: input, shape index: {}]
  %s7 = inlined_call_operand.vmem [shape: f32[3,2,1], index: 7, kind: input, shape index: {}]
  %s8 = inlined_call_operand.vmem [shape: bf16[32,8], index: 8, kind: input, shape index: {}]
  %s9 = inlined_call_operand.vmem [shape: f32[32,1], index: 9, kind: input, shape index: {}]
  %s10 = inlined_call_operand.vmem [shape: f32[32,1], index: 10, kind: input, shape index: {}]
  %s11 = inlined_call_operand.vmem [shape: bf16[2,32,256], index: 11, kind: output, shape index: {}]
  %s12 = sld [smem:[#allocation0]]
  $region77: #{bottle2neck_forward.1} parent=0
    _
  %s14 = ssub.s32 1, %s12
  %s15 = scalar_select 0, %s14, %s12
  loop: start=0, step=1, limit=4
  $region2: #{bottle2neck_forward.1} parent=0 // loop_pre_header
    _
  $region3: #{bottle2neck_forward.1} parent=0 // loop_header
    %s17 = sphi 0, %s21
    %p18 = scmp.ge.s32.totalorder %s17, 4
    %s27 = sphi 0, %s29
    %s30 = sphi 0, %s27
    %s31 = sphi 0, %s30
    %s47 = sphi 0, %s31
    %s51 = sphi 0, %s51
    %s53 = sphi 0, %s51
    %s54 = sphi 0, %s53
    %s68 = sphi 0, %s54
    %s72 = sphi 0, %s72
    %s74 = sphi 0, %s72
    %s75 = sphi 0, %s74
    %s89 = sphi 0, %s75
    %s93 = sphi 0, %s93
    %s95 = sphi 0, %s93
    %s96 = sphi 0, %s95
    %s110 = sphi 0, %s96
    %s114 = sphi 0, %s114
    %s116 = sphi 0, %s114
    %s117 = sphi 0, %s116
    %s131 = sphi 0, %s117
    %s135 = sphi 0, %s135
    %s137 = sphi 0, %s135
    %s138 = sphi 0, %s137
    %s152 = sphi 0, %s138
    %s156 = sphi 0, %s156
    %s158 = sphi 0, %s156
    %s159 = sphi 0, %s158
    %s173 = sphi 0, %s159
    %s177 = sphi 0, %s177
    %s179 = sphi 0, %s177
    %s180 = sphi 0, %s179
    %s194 = sphi 0, %s180
    %s198 = sphi 0, %s198
    %s200 = sphi 0, %s198
    %s201 = sphi 0, %s200
    %s215 = sphi 0, %s201
    %s219 = sphi 0, %s219
    %s221 = sphi 0, %s219
    %s222 = sphi 0, %s221
    %s236 = sphi 0, %s222
    %s240 = sphi 0, %s240
    %s242 = sphi 0, %s240
    %s243 = sphi 0, %s242
    %s257 = sphi 0, %s243
    %s263 = sphi 0, %s265
    %s266 = sphi 0, %s263
    %s267 = sphi 0, %s266
    %s283 = sphi 0, %s267
  $region4: #{bottle2neck_forward.1} parent=0 // loop_header_branch
    %20 = sbr.rel (%p18) target = $region8
  $region5: #{bottle2neck_forward.1} parent=0 // loop_body
    %s22 = ssub.s32 %s17, 1
    %s23 = ssub.s32 %s17, 2
    %s24 = sadd.s32 %s17, 1
    %s25 = ssub.s32 %s17, %s24
    %p26 = scmp.eq.s32.totalorder %s25, 0
    %s28 = sadd.s32 %s27, 1
    %s29 = scalar_select %p26, %s27, %s28
    %p32 = pneg %p26
    %p33 = scmp.eq.s32.totalorder %s17, 1
    %p34 = por %p32, %p33
    %p35 = scmp.ne.s32.totalorder %s27, %s30
    %p36 = scmp.eq.s32.totalorder %s17, 0
    %p37 = por %p35, %p36
    %p38 = scmp.ne.s32.totalorder %s27, %s30
    %p39 = scmp.eq.s32.totalorder %s22, 1
    %p40 = por %p38, %p39
    %p41 = scmp.ne.s32.totalorder %s30, %s31
    %p42 = scmp.eq.s32.totalorder %s22, 0
    %p43 = por %p41, %p42
    %p44 = scmp.ne.s32.totalorder %s30, %s31
    %p45 = scmp.eq.s32.totalorder %s23, 1
    %p46 = por %p44, %p45
    %p48 = scmp.ne.s32.totalorder %s31, %s47
    %p49 = scmp.eq.s32.totalorder %s23, 0
    %p50 = por %p48, %p49
    %s52 = sadd.s32 %s51, 1
    %p55 = scmp.eq.s32.totalorder %s17, 1
    %p56 = scmp.ne.s32.totalorder %s51, %s53
    %p57 = scmp.eq.s32.totalorder %s17, 0
    %p58 = por %p56, %p57
    %p59 = scmp.ne.s32.totalorder %s51, %s53
    %p60 = scmp.eq.s32.totalorder %s22, 1
    %p61 = por %p59, %p60
    %p62 = scmp.ne.s32.totalorder %s53, %s54
    %p63 = scmp.eq.s32.totalorder %s22, 0
    %p64 = por %p62, %p63
    %p65 = scmp.ne.s32.totalorder %s53, %s54
    %p66 = scmp.eq.s32.totalorder %s23, 1
    %p67 = por %p65, %p66
    %p69 = scmp.ne.s32.totalorder %s54, %s68
    %p70 = scmp.eq.s32.totalorder %s23, 0
    %p71 = por %p69, %p70
    %s73 = sadd.s32 %s72, 1
    %p76 = scmp.eq.s32.totalorder %s17, 1
    %p77 = scmp.ne.s32.totalorder %s72, %s74
    %p78 = scmp.eq.s32.totalorder %s17, 0
    %p79 = por %p77, %p78
    %p80 = scmp.ne.s32.totalorder %s72, %s74
    %p81 = scmp.eq.s32.totalorder %s22, 1
    %p82 = por %p80, %p81
    %p83 = scmp.ne.s32.totalorder %s74, %s75
    %p84 = scmp.eq.s32.totalorder %s22, 0
    %p85 = por %p83, %p84
    %p86 = scmp.ne.s32.totalorder %s74, %s75
    %p87 = scmp.eq.s32.totalorder %s23, 1
    %p88 = por %p86, %p87
    %p90 = scmp.ne.s32.totalorder %s75, %s89
    %p91 = scmp.eq.s32.totalorder %s23, 0
    %p92 = por %p90, %p91
    %s94 = sadd.s32 %s93, 1
    %p97 = scmp.eq.s32.totalorder %s17, 1
    %p98 = scmp.ne.s32.totalorder %s93, %s95
    %p99 = scmp.eq.s32.totalorder %s17, 0
    %p100 = por %p98, %p99
    %p101 = scmp.ne.s32.totalorder %s93, %s95
    %p102 = scmp.eq.s32.totalorder %s22, 1
    %p103 = por %p101, %p102
    %p104 = scmp.ne.s32.totalorder %s95, %s96
    %p105 = scmp.eq.s32.totalorder %s22, 0
    %p106 = por %p104, %p105
    %p107 = scmp.ne.s32.totalorder %s95, %s96
    %p108 = scmp.eq.s32.totalorder %s23, 1
    %p109 = por %p107, %p108
    %p111 = scmp.ne.s32.totalorder %s96, %s110
    %p112 = scmp.eq.s32.totalorder %s23, 0
    %p113 = por %p111, %p112
    %s115 = sadd.s32 %s114, 1
    %p118 = scmp.eq.s32.totalorder %s17, 1
    %p119 = scmp.ne.s32.totalorder %s114, %s116
    %p120 = scmp.eq.s32.totalorder %s17, 0
    %p121 = por %p119, %p120
    %p122 = scmp.ne.s32.totalorder %s114, %s116
    %p123 = scmp.eq.s32.totalorder %s22, 1
    %p124 = por %p122, %p123
    %p125 = scmp.ne.s32.totalorder %s116, %s117
    %p126 = scmp.eq.s32.totalorder %s22, 0
    %p127 = por %p125, %p126
    %p128 = scmp.ne.s32.totalorder %s116, %s117
    %p129 = scmp.eq.s32.totalorder %s23, 1
    %p130 = por %p128, %p129
    %p132 = scmp.ne.s32.totalorder %s117, %s131
    %p133 = scmp.eq.s32.totalorder %s23, 0
    %p134 = por %p132, %p133
    %s136 = sadd.s32 %s135, 1
    %p139 = scmp.eq.s32.totalorder %s17, 1
    %p140 = scmp.ne.s32.totalorder %s135, %s137
    %p141 = scmp.eq.s32.totalorder %s17, 0
    %p142 = por %p140, %p141
    %p143 = scmp.ne.s32.totalorder %s135, %s137
    %p144 = scmp.eq.s32.totalorder %s22, 1
    %p145 = por %p143, %p144
    %p146 = scmp.ne.s32.totalorder %s137, %s138
    %p147 = scmp.eq.s32.totalorder %s22, 0
    %p148 = por %p146, %p147
    %p149 = scmp.ne.s32.totalorder %s137, %s138
    %p150 = scmp.eq.s32.totalorder %s23, 1
    %p151 = por %p149, %p150
    %p153 = scmp.ne.s32.totalorder %s138, %s152
    %p154 = scmp.eq.s32.totalorder %s23, 0
    %p155 = por %p153, %p154
    %s157 = sadd.s32 %s156, 1
    %p160 = scmp.eq.s32.totalorder %s17, 1
    %p161 = scmp.ne.s32.totalorder %s156, %s158
    %p162 = scmp.eq.s32.totalorder %s17, 0
    %p163 = por %p161, %p162
    %p164 = scmp.ne.s32.totalorder %s156, %s158
    %p165 = scmp.eq.s32.totalorder %s22, 1
    %p166 = por %p164, %p165
    %p167 = scmp.ne.s32.totalorder %s158, %s159
    %p168 = scmp.eq.s32.totalorder %s22, 0
    %p169 = por %p167, %p168
    %p170 = scmp.ne.s32.totalorder %s158, %s159
    %p171 = scmp.eq.s32.totalorder %s23, 1
    %p172 = por %p170, %p171
    %p174 = scmp.ne.s32.totalorder %s159, %s173
    %p175 = scmp.eq.s32.totalorder %s23, 0
    %p176 = por %p174, %p175
    %s178 = sadd.s32 %s177, 1
    %p181 = scmp.eq.s32.totalorder %s17, 1
    %p182 = scmp.ne.s32.totalorder %s177, %s179
    %p183 = scmp.eq.s32.totalorder %s17, 0
    %p184 = por %p182, %p183
    %p185 = scmp.ne.s32.totalorder %s177, %s179
    %p186 = scmp.eq.s32.totalorder %s22, 1
    %p187 = por %p185, %p186
    %p188 = scmp.ne.s32.totalorder %s179, %s180
    %p189 = scmp.eq.s32.totalorder %s22, 0
    %p190 = por %p188, %p189
    %p191 = scmp.ne.s32.totalorder %s179, %s180
    %p192 = scmp.eq.s32.totalorder %s23, 1
    %p193 = por %p191, %p192
    %p195 = scmp.ne.s32.totalorder %s180, %s194
    %p196 = scmp.eq.s32.totalorder %s23, 0
    %p197 = por %p195, %p196
    %s199 = sadd.s32 %s198, 1
    %p202 = scmp.eq.s32.totalorder %s17, 1
    %p203 = scmp.ne.s32.totalorder %s198, %s200
    %p204 = scmp.eq.s32.totalorder %s17, 0
    %p205 = por %p203, %p204
    %p206 = scmp.ne.s32.totalorder %s198, %s200
    %p207 = scmp.eq.s32.totalorder %s22, 1
    %p208 = por %p206, %p207
    %p209 = scmp.ne.s32.totalorder %s200, %s201
    %p210 = scmp.eq.s32.totalorder %s22, 0
    %p211 = por %p209, %p210
    %p212 = scmp.ne.s32.totalorder %s200, %s201
    %p213 = scmp.eq.s32.totalorder %s23, 1
    %p214 = por %p212, %p213
    %p216 = scmp.ne.s32.totalorder %s201, %s215
    %p217 = scmp.eq.s32.totalorder %s23, 0
    %p218 = por %p216, %p217
    %s220 = sadd.s32 %s219, 1
    %p223 = scmp.eq.s32.totalorder %s17, 1
    %p224 = scmp.ne.s32.totalorder %s219, %s221
    %p225 = scmp.eq.s32.totalorder %s17, 0
    %p226 = por %p224, %p225
    %p227 = scmp.ne.s32.totalorder %s219, %s221
    %p228 = scmp.eq.s32.totalorder %s22, 1
    %p229 = por %p227, %p228
    %p230 = scmp.ne.s32.totalorder %s221, %s222
    %p231 = scmp.eq.s32.totalorder %s22, 0
    %p232 = por %p230, %p231
    %p233 = scmp.ne.s32.totalorder %s221, %s222
    %p234 = scmp.eq.s32.totalorder %s23, 1
    %p235 = por %p233, %p234
    %p237 = scmp.ne.s32.totalorder %s222, %s236
    %p238 = scmp.eq.s32.totalorder %s23, 0
    %p239 = por %p237, %p238
    %s241 = sadd.s32 %s240, 1
    %p244 = scmp.eq.s32.totalorder %s17, 1
    %p245 = scmp.ne.s32.totalorder %s240, %s242
    %p246 = scmp.eq.s32.totalorder %s17, 0
    %p247 = por %p245, %p246
    %p248 = scmp.ne.s32.totalorder %s240, %s242
    %p249 = scmp.eq.s32.totalorder %s22, 1
    %p250 = por %p248, %p249
    %p251 = scmp.ne.s32.totalorder %s242, %s243
    %p252 = scmp.eq.s32.totalorder %s22, 0
    %p253 = por %p251, %p252
    %p254 = scmp.ne.s32.totalorder %s242, %s243
    %p255 = scmp.eq.s32.totalorder %s23, 1
    %p256 = por %p254, %p255
    %p258 = scmp.ne.s32.totalorder %s243, %s257
    %p259 = scmp.eq.s32.totalorder %s23, 0
    %p260 = por %p258, %p259
    %s261 = ssub.s32 %s17, %s24
    %p262 = scmp.eq.s32.totalorder %s261, 0
    %s264 = sadd.s32 %s263, 1
    %s265 = scalar_select %p262, %s263, %s264
    %p268 = pneg %p262
    %p269 = scmp.eq.s32.totalorder %s17, 1
    %p270 = por %p268, %p269
    %p271 = scmp.ne.s32.totalorder %s263, %s266
    %p272 = scmp.eq.s32.totalorder %s17, 0
    %p273 = por %p271, %p272
    %p274 = scmp.ne.s32.totalorder %s263, %s266
    %p275 = scmp.eq.s32.totalorder %s22, 1
    %p276 = por %p274, %p275
    %p277 = scmp.ne.s32.totalorder %s266, %s267
    %p278 = scmp.eq.s32.totalorder %s22, 0
    %p279 = por %p277, %p278
    %p280 = scmp.ne.s32.totalorder %s266, %s267
    %p281 = scmp.eq.s32.totalorder %s23, 1
    %p282 = por %p280, %p281
    %p284 = scmp.ne.s32.totalorder %s267, %s283
    %p285 = scmp.eq.s32.totalorder %s23, 0
    %p286 = por %p284, %p285
    %p287 = scmp.le.s32.totalorder 1, %s17
    %p288 = scmp.lt.s32.totalorder %s17, 3
    %p289 = pnand %p287, %p288
    %p290 = pneg %p289
    // Predicated region
    $region9: #{bottle2neck_forward.1} parent=5 // pred_check
      _
    $region10: #{bottle2neck_forward.1} parent=5 // pred_check_branch
      %292 = sbr.rel (%p289) target = $region12
    $region11: #{bottle2neck_forward.1} parent=5 // pred_region
      %s293 = ssub.s32 %s17, 1
      // Predicated region
      $region13: #{bottle2neck_forward.1} parent=11 // pred_check
        %p294 = pneg %p64
      $region14: #{bottle2neck_forward.1} parent=11 // pred_check_branch
        %296 = sbr.rel (%p294) target = $region16
      $region15: #{bottle2neck_forward.1} parent=11 // pred_region
        _
      $region16: #{bottle2neck_forward.1} parent=11 // pred_fallthru
        _
      // Predicated region
      $region17: #{bottle2neck_forward.1} parent=11 // pred_check
        %p297 = pneg %p85
      $region18: #{bottle2neck_forward.1} parent=11 // pred_check_branch
        %299 = sbr.rel (%p297) target = $region20
      $region19: #{bottle2neck_forward.1} parent=11 // pred_region
        _
      $region20: #{bottle2neck_forward.1} parent=11 // pred_fallthru
        _
      // Predicated region
      $region21: #{bottle2neck_forward.1} parent=11 // pred_check
        %p300 = pneg %p106
      $region22: #{bottle2neck_forward.1} parent=11 // pred_check_branch
        %302 = sbr.rel (%p300) target = $region24
      $region23: #{bottle2neck_forward.1} parent=11 // pred_region
        _
      $region24: #{bottle2neck_forward.1} parent=11 // pred_fallthru
        _
      // Predicated region
      $region25: #{bottle2neck_forward.1} parent=11 // pred_check
        %p303 = pneg %p127
      $region26: #{bottle2neck_forward.1} parent=11 // pred_check_branch
        %305 = sbr.rel (%p303) target = $region28
      $region27: #{bottle2neck_forward.1} parent=11 // pred_region
        _
      $region28: #{bottle2neck_forward.1} parent=11 // pred_fallthru
        _
      // Predicated region
      $region29: #{bottle2neck_forward.1} parent=11 // pred_check
        %p306 = pneg %p148
      $region30: #{bottle2neck_forward.1} parent=11 // pred_check_branch
        %308 = sbr.rel (%p306) target = $region32
      $region31: #{bottle2neck_forward.1} parent=11 // pred_region
        _
      $region32: #{bottle2neck_forward.1} parent=11 // pred_fallthru
        _
      // Predicated region
      $region33: #{bottle2neck_forward.1} parent=11 // pred_check
        %p309 = pneg %p169
      $region34: #{bottle2neck_forward.1} parent=11 // pred_check_branch
        %311 = sbr.rel (%p309) target = $region36
      $region35: #{bottle2neck_forward.1} parent=11 // pred_region
        _
      $region36: #{bottle2neck_forward.1} parent=11 // pred_fallthru
        _
      // Predicated region
      $region37: #{bottle2neck_forward.1} parent=11 // pred_check
        %p312 = pneg %p190
      $region38: #{bottle2neck_forward.1} parent=11 // pred_check_branch
        %314 = sbr.rel (%p312) target = $region40
      $region39: #{bottle2neck_forward.1} parent=11 // pred_region
        _
      $region40: #{bottle2neck_forward.1} parent=11 // pred_fallthru
        _
      // Predicated region
      $region41: #{bottle2neck_forward.1} parent=11 // pred_check
        %p315 = pneg %p211
      $region42: #{bottle2neck_forward.1} parent=11 // pred_check_branch
        %317 = sbr.rel (%p315) target = $region44
      $region43: #{bottle2neck_forward.1} parent=11 // pred_region
        _
      $region44: #{bottle2neck_forward.1} parent=11 // pred_fallthru
        _
      // Predicated region
      $region45: #{bottle2neck_forward.1} parent=11 // pred_check
        %p318 = pneg %p232
      $region46: #{bottle2neck_forward.1} parent=11 // pred_check_branch
        %320 = sbr.rel (%p318) target = $region48
      $region47: #{bottle2neck_forward.1} parent=11 // pred_region
        _
      $region48: #{bottle2neck_forward.1} parent=11 // pred_fallthru
        _
      // Predicated region
      $region49: #{bottle2neck_forward.1} parent=11 // pred_check
        %p321 = pneg %p253
      $region50: #{bottle2neck_forward.1} parent=11 // pred_check_branch
        %323 = sbr.rel (%p321) target = $region52
      $region51: #{bottle2neck_forward.1} parent=11 // pred_region
        _
      $region52: #{bottle2neck_forward.1} parent=11 // pred_fallthru
        _
    $region12: #{bottle2neck_forward.1} parent=5 // pred_fallthru
      _
    %p324 = scmp.lt.s32.totalorder %s17, 2
    // Predicated region
    $region53: #{bottle2neck_forward.1} parent=5 // pred_check
      %p325 = pneg %p324
    $region54: #{bottle2neck_forward.1} parent=5 // pred_check_branch
      %327 = sbr.rel (%p325) target = $region56
    $region55: #{bottle2neck_forward.1} parent=5 // pred_region
      // Predicated region
      $region57: #{bottle2neck_forward.1} parent=55 // pred_check
        %p328 = pneg %p37
      $region58: #{bottle2neck_forward.1} parent=55 // pred_check_branch
        %330 = sbr.rel (%p328) target = $region60
      $region59: #{bottle2neck_forward.1} parent=55 // pred_region
        %p331 = scmp.lt.s32.totalorder %s17, 1
        %s332 = scalar_select %p331, %s17, 1
        %s333 = smul.addr %s332, 8
        %s334 = smul.addr %s333, 4
        %s335 = scalar_lea.vmem %s0, %s334
      $region60: #{bottle2neck_forward.1} parent=55 // pred_fallthru
        _
    $region56: #{bottle2neck_forward.1} parent=5 // pred_fallthru
      _
    %p336 = scmp.le.s32.totalorder 1, %s17
    %p337 = scmp.lt.s32.totalorder %s17, 3
    %p338 = pnand %p336, %p337
    %p339 = pneg %p338
    // Predicated region
    $region61: #{bottle2neck_forward.1} parent=5 // pred_check
      _
    $region62: #{bottle2neck_forward.1} parent=5 // pred_check_branch
      %341 = sbr.rel (%p338) target = $region64
    $region63: #{bottle2neck_forward.1} parent=5 // pred_region
      %s342 = ssub.s32 %s17, 1
      %p343 = scmp.lt.s32.totalorder %s22, 1
      %s344 = scalar_select %p343, %s22, 1
      %s345 = smul.addr %s344, 8
      %s346 = smul.addr %s345, 4
      %s347 = scalar_lea.vmem %s0, %s346
      %p348 = pneg %p43
      %p349 = pneg %p40
      %p350 = pneg %p64
      %p351 = pneg %p61
      %p352 = pneg %p85
      %p353 = pneg %p82
      %p354 = pneg %p106
      %p355 = pneg %p103
      %p356 = pneg %p127
      %p357 = pneg %p124
      %p358 = pneg %p148
      %p359 = pneg %p145
      %p360 = pneg %p169
      %p361 = pneg %p166
      %p362 = pneg %p190
      %p363 = pneg %p187
      %p364 = pneg %p211
      %p365 = pneg %p208
      %p366 = pneg %p232
      %p367 = pneg %p229
      %p368 = pneg %p253
      %p369 = pneg %p250
      %p370 = pneg %p279
      %p371 = pneg %p276
      %p372 = scmp.lt.s32.totalorder %s22, 1
      %s373 = scalar_select %p372, %s22, 1
      %s374 = smul.addr %s373, 8
      %s375 = smul.addr %s374, 4
      %s376 = scalar_lea.vmem %s11, %s375
      %p377 = scmp.lt.s32.totalorder %s22, 1
      %s378 = scalar_select %p377, %s22, 1
      %s379 = smul.addr %s378, 8
      %s380 = smul.addr %s379, 4
      %s381 = scalar_lea.vmem %s0, %s380
      %p382 = scmp.lt.s32.totalorder %s22, 1
      %s383 = scalar_select %p382, %s22, 1
      %s384 = smul.addr %s383, 8
      %s385 = smul.addr %s384, 4
      %s386 = scalar_lea.vmem %s11, %s385
      %v388 = vld [vmem:[%s381] sm:$0xff]
      %v389 = vld [vmem:[%s381 + $0x8] sm:$0xff]
      %v390 = vld [vmem:[%s381 + $0x10] sm:$0xff]
      %v391 = vld [vmem:[%s381 + $0x18] sm:$0xff]
      %v392 = vld [vmem:[%s2] sm:$0xf]
      %v397 = vunpack.c.l.b16 %v388
      %v398 = vunpack.c.h.b16 %v388
      %v399 = vunpack.c.l.b16 %v389
      %v400 = vunpack.c.h.b16 %v389
      %v401 = vunpack.c.l.b16 %v390
      %v402 = vunpack.c.h.b16 %v390
      %v403 = vunpack.c.l.b16 %v391
      %v404 = vunpack.c.h.b16 %v391
      %v405 = vpack.c.b16 %v399, %v397
      %v406 = vpack.c.b16 %v400, %v398
      %v407 = vpack.c.b16 %v403, %v401
      %v408 = vpack.c.b16 %v404, %v402
      %vm413 = vcmask 261120
      %v415 = vsel %vm413, %v392, 0
      %417 = vmatpush.bf16.msra.mxu0 0
      %418 = vmatpush.bf16.msra.mxu0 0
      %419 = vmatpush.bf16.msra.mxu0 0
      %420 = vmatpush.bf16.msra.mxu0 0
      %421 = vmatpush.bf16.msra.mxu0 0
      %422 = vmatpush.bf16.msra.mxu0 0
      %423 = vmatpush.bf16.msra.mxu0 %v407
      %424 = vmatpush.bf16.msra.mxu0 %v405
      %425 = vmatmul.bf16.gmra.mxu0 %v415
      %v426 = vpop.f32.mrf.mxu0
      %v427 = vadd.f32 0.0, %v426
      %v428 = vpop.f32.mrf.mxu0
      %429 = vdwg.mxu0
      %430 = vmatpush.bf16.msra.mxu0 0
      %431 = vmatpush.bf16.msra.mxu0 0
      %432 = vmatpush.bf16.msra.mxu0 0
      %433 = vmatpush.bf16.msra.mxu0 0
      %434 = vmatpush.bf16.msra.mxu0 0
      %435 = vmatpush.bf16.msra.mxu0 0
      %436 = vmatpush.bf16.msra.mxu0 %v408
      %437 = vmatpush.bf16.msra.mxu0 %v406
      %438 = vmatmul.bf16.gmra.mxu0 %v415
      %v439 = vpop.f32.mrf.mxu0
      %v440 = vadd.f32 0.0, %v439
      %v441 = vpop.f32.mrf.mxu0
      %442 = vdwg.mxu0
      %v443 = vld [vmem:[%s3] sm:$0xff]
      %445 = vset.pattern.permute.xlu0 0
      %446 = vperm.xlu0 %445, %v443
      %v447 = vpop.permute.xlu0 %446
      %v449 = vmul.f32 %v427, %v447
      %v450 = vmul.f32 %v440, %v447
      %v451 = vld [vmem:[%s4] sm:$0xff]
      %453 = vset.pattern.permute.xlu0 0
      %454 = vperm.xlu0 %453, %v451
      %v455 = vpop.permute.xlu0 %454
      %v457 = vadd.f32 %v449, %v455
      %v458 = vadd.f32 %v450, %v455
      %v459 = vmax.f32 %v457, 0.0
      %v460 = vmax.f32 %v458, 0.0
      %v461 = vpack.c.bf16 %v460, %v459
      %462 = vst [vmem:[#allocation2] sm:$0xff] %v461
      %v463 = vld [vmem:[#allocation2] sm:$0x11]
      %v464 = vunpack.c.l.bf16 %v463
      %v465 = vunpack.c.h.bf16 %v463
      %v466 = vld [vmem:[%s5] sm:$0x1]
      %467 = vrot.lane.b32.xlu0 %v464, 17
      %v468 = vpop.permute.xlu0 %467
      %469 = vrot.lane.b32.xlu0 %v465, 17
      %v470 = vpop.permute.xlu0 %469
      %v471 = vlaneseq
      %v472 = vand.u32 %v471, 127
      %vm473 = vcmp.lt.s32.totalorder %v472, 17
      %v474 = vsel %vm473, %v468, %v470
      %v475 = vsel %vm473, %v470, %v468
      %v476 = vld [vmem:[%s1] ss:$8 sm:$0x3]
      %v478 = vperm.slane %v476, 0
      %v479 = vperm.slane %v476, 1
      %v482 = vmul.f32 %v475, %v478
      %v483 = vmul.f32 %v474, %v479
      %v484 = vpack.c.bf16 %v482, %v482
      %v485 = vpack.c.bf16 %v483, %v483
      %486 = vrot.lane.b32.xlu0 %v464, 16
      %v487 = vpop.permute.xlu0 %486
      %488 = vrot.lane.b32.xlu0 %v465, 16
      %v489 = vpop.permute.xlu0 %488
      %vm490 = vcmp.lt.s32.totalorder %v472, 16
      %v491 = vsel %vm490, %v487, %v489
      %v492 = vsel %vm490, %v489, %v487
      %s493 = scalar_lea.vmem %s1, 1
      %v494 = vld [vmem:[%s493] ss:$8 sm:$0x3]
      %v496 = vperm.slane %v494, 0
      %v497 = vperm.slane %v494, 1
      %v500 = vmul.f32 %v492, %v496
      %v501 = vmul.f32 %v491, %v497
      %v502 = vpack.c.bf16 %v500, %v500
      %v503 = vpack.c.bf16 %v501, %v501
      %505 = vst [vmem:[#allocation1] ss:$9 sm:$0xff] %v466
      %v506 = vld [vmem:[#allocation1] sm:$0xff]
      %508 = vrot.lane.b32.xlu0 %v506, 126
      %v509 = vpop.permute.xlu0 %508
      %vm510 = vcmask 15360
      %v512 = vsel %vm510, %v509, 0
      %vm514 = vcmask 1040384
      %v516 = vsel %vm514, %v502, 0
      %v519 = vsel %vm514, %v503, 0
      %521 = vmatpush.bf16.msra.mxu0 0
      %522 = vmatpush.bf16.msra.mxu0 0
      %523 = vmatpush.bf16.msra.mxu0 0
      %524 = vmatpush.bf16.msra.mxu0 0
      %525 = vmatpush.bf16.msra.mxu0 0
      %526 = vmatpush.bf16.msra.mxu0 0
      %527 = vmatpush.bf16.msra.mxu0 0
      %528 = vmatpush.bf16.msra.mxu0 %v516
      %529 = vmatmul.bf16.gmra.mxu0 %v512
      %v530 = vpop.f32.mrf.mxu0
      %v531 = vadd.f32 0.0, %v530
      %v532 = vpop.f32.mrf.mxu0
      %533 = vdwg.mxu0
      %534 = vmatpush.bf16.msra.mxu0 0
      %535 = vmatpush.bf16.msra.mxu0 0
      %536 = vmatpush.bf16.msra.mxu0 0
      %537 = vmatpush.bf16.msra.mxu0 0
      %538 = vmatpush.bf16.msra.mxu0 0
      %539 = vmatpush.bf16.msra.mxu0 0
      %540 = vmatpush.bf16.msra.mxu0 0
      %541 = vmatpush.bf16.msra.mxu0 %v519
      %542 = vmatmul.bf16.gmra.mxu0 %v512
      %v543 = vpop.f32.mrf.mxu0
      %v544 = vadd.f32 0.0, %v543
      %v545 = vpop.f32.mrf.mxu0
      %546 = vdwg.mxu0
      %v547 = vsel %vm510, %v466, 0
      %v550 = vsel %vm514, %v484, 0
      %v553 = vsel %vm514, %v485, 0
      %555 = vmatpush.bf16.msra.mxu0 0
      %556 = vmatpush.bf16.msra.mxu0 0
      %557 = vmatpush.bf16.msra.mxu0 0
      %558 = vmatpush.bf16.msra.mxu0 0
      %559 = vmatpush.bf16.msra.mxu0 0
      %560 = vmatpush.bf16.msra.mxu0 0
      %561 = vmatpush.bf16.msra.mxu0 0
      %562 = vmatpush.bf16.msra.mxu0 %v550
      %563 = vmatmul.bf16.gmra.mxu0 %v547
      %v564 = vpop.f32.mrf.mxu0
      %v565 = vadd.f32 %v531, %v564
      %v566 = vpop.f32.mrf.mxu0
      %567 = vdwg.mxu0
      %568 = vmatpush.bf16.msra.mxu0 0
      %569 = vmatpush.bf16.msra.mxu0 0
      %570 = vmatpush.bf16.msra.mxu0 0
      %571 = vmatpush.bf16.msra.mxu0 0
      %572 = vmatpush.bf16.msra.mxu0 0
      %573 = vmatpush.bf16.msra.mxu0 0
      %574 = vmatpush.bf16.msra.mxu0 0
      %575 = vmatpush.bf16.msra.mxu0 %v553
      %576 = vmatmul.bf16.gmra.mxu0 %v547
      %v577 = vpop.f32.mrf.mxu0
      %v578 = vadd.f32 %v544, %v577
      %v579 = vpop.f32.mrf.mxu0
      %580 = vdwg.mxu0
      %581 = vrot.lane.b32.xlu0 %v464, 15
      %v582 = vpop.permute.xlu0 %581
      %583 = vrot.lane.b32.xlu0 %v465, 15
      %v584 = vpop.permute.xlu0 %583
      %vm585 = vcmp.lt.s32.totalorder %v472, 15
      %v586 = vsel %vm585, %v582, %v584
      %v587 = vsel %vm585, %v584, %v582
      %s588 = scalar_lea.vmem %s1, 2
      %v589 = vld [vmem:[%s588] ss:$8 sm:$0x3]
      %v591 = vperm.slane %v589, 0
      %v592 = vperm.slane %v589, 1
      %v595 = vmul.f32 %v587, %v591
      %v596 = vmul.f32 %v586, %v592
      %v597 = vpack.c.bf16 %v595, %v595
      %v598 = vpack.c.bf16 %v596, %v596
      %599 = vst [vmem:[#allocation1] ss:$9 sm:$0xff] %v466
      %v600 = vld [vmem:[#allocation1] sm:$0xff]
      %602 = vrot.lane.b32.xlu0 %v600, 124
      %v603 = vpop.permute.xlu0 %602
      %v605 = vsel %vm510, %v603, 0
      %v608 = vsel %vm514, %v597, 0
      %v611 = vsel %vm514, %v598, 0
      %613 = vmatpush.bf16.msra.mxu0 0
      %614 = vmatpush.bf16.msra.mxu0 0
      %615 = vmatpush.bf16.msra.mxu0 0
      %616 = vmatpush.bf16.msra.mxu0 0
      %617 = vmatpush.bf16.msra.mxu0 0
      %618 = vmatpush.bf16.msra.mxu0 0
      %619 = vmatpush.bf16.msra.mxu0 0
      %620 = vmatpush.bf16.msra.mxu0 %v608
      %621 = vmatmul.bf16.gmra.mxu0 %v605
      %v622 = vpop.f32.mrf.mxu0
      %v623 = vadd.f32 0.0, %v622
      %v624 = vpop.f32.mrf.mxu0
      %625 = vdwg.mxu0
      %626 = vmatpush.bf16.msra.mxu0 0
      %627 = vmatpush.bf16.msra.mxu0 0
      %628 = vmatpush.bf16.msra.mxu0 0
      %629 = vmatpush.bf16.msra.mxu0 0
      %630 = vmatpush.bf16.msra.mxu0 0
      %631 = vmatpush.bf16.msra.mxu0 0
      %632 = vmatpush.bf16.msra.mxu0 0
      %633 = vmatpush.bf16.msra.mxu0 %v611
      %634 = vmatmul.bf16.gmra.mxu0 %v605
      %v635 = vpop.f32.mrf.mxu0
      %v636 = vadd.f32 0.0, %v635
      %v637 = vpop.f32.mrf.mxu0
      %638 = vdwg.mxu0
      %v639 = vadd.f32 %v565, %v623
      %v640 = vadd.f32 %v578, %v636
      %641 = vrot.lane.b32.xlu0 %v464, 1
      %v642 = vpop.permute.xlu0 %641
      %643 = vrot.lane.b32.xlu0 %v465, 1
      %v644 = vpop.permute.xlu0 %643
      %vm645 = vcmp.lt.s32.totalorder %v472, 1
      %v646 = vsel %vm645, %v642, %v644
      %v647 = vsel %vm645, %v644, %v642
      %s648 = scalar_lea.vmem %s1, 3
      %v649 = vld [vmem:[%s648] ss:$8 sm:$0x3]
      %v651 = vperm.slane %v649, 0
      %v652 = vperm.slane %v649, 1
      %v655 = vmul.f32 %v647, %v651
      %v656 = vmul.f32 %v646, %v652
      %v657 = vpack.c.bf16 %v655, %v655
      %v658 = vpack.c.bf16 %v656, %v656
      %659 = vst [vmem:[#allocation1] ss:$9 sm:$0xff] %v466
      %v660 = vld [vmem:[#allocation1] sm:$0xff]
      %662 = vrot.lane.b32.xlu0 %v660, 122
      %v663 = vpop.permute.xlu0 %662
      %v665 = vsel %vm510, %v663, 0
      %v668 = vsel %vm514, %v657, 0
      %v671 = vsel %vm514, %v658, 0
      %673 = vmatpush.bf16.msra.mxu0 0
      %674 = vmatpush.bf16.msra.mxu0 0
      %675 = vmatpush.bf16.msra.mxu0 0
      %676 = vmatpush.bf16.msra.mxu0 0
      %677 = vmatpush.bf16.msra.mxu0 0
      %678 = vmatpush.bf16.msra.mxu0 0
      %679 = vmatpush.bf16.msra.mxu0 0
      %680 = vmatpush.bf16.msra.mxu0 %v668
      %681 = vmatmul.bf16.gmra.mxu0 %v665
      %v682 = vpop.f32.mrf.mxu0
      %v683 = vadd.f32 0.0, %v682
      %v684 = vpop.f32.mrf.mxu0
      %685 = vdwg.mxu0
      %686 = vmatpush.bf16.msra.mxu0 0
      %687 = vmatpush.bf16.msra.mxu0 0
      %688 = vmatpush.bf16.msra.mxu0 0
      %689 = vmatpush.bf16.msra.mxu0 0
      %690 = vmatpush.bf16.msra.mxu0 0
      %691 = vmatpush.bf16.msra.mxu0 0
      %692 = vmatpush.bf16.msra.mxu0 0
      %693 = vmatpush.bf16.msra.mxu0 %v671
      %694 = vmatmul.bf16.gmra.mxu0 %v665
      %v695 = vpop.f32.mrf.mxu0
      %v696 = vadd.f32 0.0, %v695
      %v697 = vpop.f32.mrf.mxu0
      %698 = vdwg.mxu0
      %v699 = vadd.f32 %v639, %v683
      %v700 = vadd.f32 %v640, %v696
      %701 = vst [vmem:[#allocation1] ss:$9 sm:$0xff] %v466
      %v702 = vld [vmem:[#allocation1] sm:$0xff]
      %704 = vrot.lane.b32.xlu0 %v702, 120
      %v705 = vpop.permute.xlu0 %704
      %v707 = vunpack.c.l.b16 %v463
      %v708 = vunpack.c.h.b16 %v463
      %v709 = vpack.c.b16 %v707, %v707
      %v710 = vpack.c.b16 %v708, %v708
      %v712 = vsel %vm510, %v705, 0
      %v715 = vsel %vm514, %v709, 0
      %v718 = vsel %vm514, %v710, 0
      %720 = vmatpush.bf16.msra.mxu0 0
      %721 = vmatpush.bf16.msra.mxu0 0
      %722 = vmatpush.bf16.msra.mxu0 0
      %723 = vmatpush.bf16.msra.mxu0 0
      %724 = vmatpush.bf16.msra.mxu0 0
      %725 = vmatpush.bf16.msra.mxu0 0
      %726 = vmatpush.bf16.msra.mxu0 0
      %727 = vmatpush.bf16.msra.mxu0 %v715
      %728 = vmatmul.bf16.gmra.mxu0 %v712
      %v729 = vpop.f32.mrf.mxu0
      %v730 = vadd.f32 0.0, %v729
      %v731 = vpop.f32.mrf.mxu0
      %732 = vdwg.mxu0
      %733 = vmatpush.bf16.msra.mxu0 0
      %734 = vmatpush.bf16.msra.mxu0 0
      %735 = vmatpush.bf16.msra.mxu0 0
      %736 = vmatpush.bf16.msra.mxu0 0
      %737 = vmatpush.bf16.msra.mxu0 0
      %738 = vmatpush.bf16.msra.mxu0 0
      %739 = vmatpush.bf16.msra.mxu0 0
      %740 = vmatpush.bf16.msra.mxu0 %v718
      %741 = vmatmul.bf16.gmra.mxu0 %v712
      %v742 = vpop.f32.mrf.mxu0
      %v743 = vadd.f32 0.0, %v742
      %v744 = vpop.f32.mrf.mxu0
      %745 = vdwg.mxu0
      %v746 = vadd.f32 %v699, %v730
      %v747 = vadd.f32 %v700, %v743
      %748 = vrot.lane.b32.xlu0 %v464, 127
      %v749 = vpop.permute.xlu0 %748
      %750 = vrot.lane.b32.xlu0 %v465, 127
      %v751 = vpop.permute.xlu0 %750
      %vm752 = vcmp.lt.s32.totalorder %v472, 127
      %v753 = vsel %vm752, %v749, %v751
      %v754 = vsel %vm752, %v751, %v749
      %s755 = scalar_lea.vmem %s1, 5
      %v756 = vld [vmem:[%s755] ss:$8 sm:$0x3]
      %v758 = vperm.slane %v756, 0
      %v759 = vperm.slane %v756, 1
      %v762 = vmul.f32 %v753, %v758
      %v763 = vmul.f32 %v754, %v759
      %v764 = vpack.c.bf16 %v762, %v762
      %v765 = vpack.c.bf16 %v763, %v763
      %766 = vst [vmem:[#allocation1] ss:$9 sm:$0xff] %v466
      %v767 = vld [vmem:[#allocation1] sm:$0xff]
      %769 = vrot.lane.b32.xlu0 %v767, 118
      %v770 = vpop.permute.xlu0 %769
      %v772 = vsel %vm510, %v770, 0
      %v775 = vsel %vm514, %v764, 0
      %v778 = vsel %vm514, %v765, 0
      %780 = vmatpush.bf16.msra.mxu0 0
      %781 = vmatpush.bf16.msra.mxu0 0
      %782 = vmatpush.bf16.msra.mxu0 0
      %783 = vmatpush.bf16.msra.mxu0 0
      %784 = vmatpush.bf16.msra.mxu0 0
      %785 = vmatpush.bf16.msra.mxu0 0
      %786 = vmatpush.bf16.msra.mxu0 0
      %787 = vmatpush.bf16.msra.mxu0 %v775
      %788 = vmatmul.bf16.gmra.mxu0 %v772
      %v789 = vpop.f32.mrf.mxu0
      %v790 = vadd.f32 0.0, %v789
      %v791 = vpop.f32.mrf.mxu0
      %792 = vdwg.mxu0
      %793 = vmatpush.bf16.msra.mxu0 0
      %794 = vmatpush.bf16.msra.mxu0 0
      %795 = vmatpush.bf16.msra.mxu0 0
      %796 = vmatpush.bf16.msra.mxu0 0
      %797 = vmatpush.bf16.msra.mxu0 0
      %798 = vmatpush.bf16.msra.mxu0 0
      %799 = vmatpush.bf16.msra.mxu0 0
      %800 = vmatpush.bf16.msra.mxu0 %v778
      %801 = vmatmul.bf16.gmra.mxu0 %v772
      %v802 = vpop.f32.mrf.mxu0
      %v803 = vadd.f32 0.0, %v802
      %v804 = vpop.f32.mrf.mxu0
      %805 = vdwg.mxu0
      %v806 = vadd.f32 %v746, %v790
      %v807 = vadd.f32 %v747, %v803
      %808 = vrot.lane.b32.xlu0 %v464, 113
      %v809 = vpop.permute.xlu0 %808
      %810 = vrot.lane.b32.xlu0 %v465, 113
      %v811 = vpop.permute.xlu0 %810
      %vm812 = vcmp.lt.s32.totalorder %v472, 113
      %v813 = vsel %vm812, %v809, %v811
      %v814 = vsel %vm812, %v811, %v809
      %s815 = scalar_lea.vmem %s1, 6
      %v816 = vld [vmem:[%s815] ss:$8 sm:$0x3]
      %v818 = vperm.slane %v816, 0
      %v819 = vperm.slane %v816, 1
      %v822 = vmul.f32 %v813, %v818
      %v823 = vmul.f32 %v814, %v819
      %v824 = vpack.c.bf16 %v822, %v822
      %v825 = vpack.c.bf16 %v823, %v823
      %826 = vst [vmem:[#allocation1] ss:$9 sm:$0xff] %v466
      %v827 = vld [vmem:[#allocation1] sm:$0xff]
      %829 = vrot.lane.b32.xlu0 %v827, 116
      %v830 = vpop.permute.xlu0 %829
      %v832 = vsel %vm510, %v830, 0
      %v835 = vsel %vm514, %v824, 0
      %v838 = vsel %vm514, %v825, 0
      %840 = vmatpush.bf16.msra.mxu0 0
      %841 = vmatpush.bf16.msra.mxu0 0
      %842 = vmatpush.bf16.msra.mxu0 0
      %843 = vmatpush.bf16.msra.mxu0 0
      %844 = vmatpush.bf16.msra.mxu0 0
      %845 = vmatpush.bf16.msra.mxu0 0
      %846 = vmatpush.bf16.msra.mxu0 0
      %847 = vmatpush.bf16.msra.mxu0 %v835
      %848 = vmatmul.bf16.gmra.mxu0 %v832
      %v849 = vpop.f32.mrf.mxu0
      %v850 = vadd.f32 0.0, %v849
      %v851 = vpop.f32.mrf.mxu0
      %852 = vdwg.mxu0
      %853 = vmatpush.bf16.msra.mxu0 0
      %854 = vmatpush.bf16.msra.mxu0 0
      %855 = vmatpush.bf16.msra.mxu0 0
      %856 = vmatpush.bf16.msra.mxu0 0
      %857 = vmatpush.bf16.msra.mxu0 0
      %858 = vmatpush.bf16.msra.mxu0 0
      %859 = vmatpush.bf16.msra.mxu0 0
      %860 = vmatpush.bf16.msra.mxu0 %v838
      %861 = vmatmul.bf16.gmra.mxu0 %v832
      %v862 = vpop.f32.mrf.mxu0
      %v863 = vadd.f32 0.0, %v862
      %v864 = vpop.f32.mrf.mxu0
      %865 = vdwg.mxu0
      %v866 = vadd.f32 %v806, %v850
      %v867 = vadd.f32 %v807, %v863
      %868 = vrot.lane.b32.xlu0 %v464, 112
      %v869 = vpop.permute.xlu0 %868
      %870 = vrot.lane.b32.xlu0 %v465, 112
      %v871 = vpop.permute.xlu0 %870
      %vm872 = vcmp.lt.s32.totalorder %v472, 112
      %v873 = vsel %vm872, %v869, %v871
      %v874 = vsel %vm872, %v871, %v869
      %s875 = scalar_lea.vmem %s1, 7
      %v876 = vld [vmem:[%s875] ss:$8 sm:$0x3]
      %v878 = vperm.slane %v876, 0
      %v879 = vperm.slane %v876, 1
      %v882 = vmul.f32 %v873, %v878
      %v883 = vmul.f32 %v874, %v879
      %v884 = vpack.c.bf16 %v882, %v882
      %v885 = vpack.c.bf16 %v883, %v883
      %886 = vst [vmem:[#allocation1] ss:$9 sm:$0xff] %v466
      %v887 = vld [vmem:[#allocation1] sm:$0xff]
      %889 = vrot.lane.b32.xlu0 %v887, 114
      %v890 = vpop.permute.xlu0 %889
      %v892 = vsel %vm510, %v890, 0
      %v895 = vsel %vm514, %v884, 0
      %v898 = vsel %vm514, %v885, 0
      %900 = vmatpush.bf16.msra.mxu0 0
      %901 = vmatpush.bf16.msra.mxu0 0
      %902 = vmatpush.bf16.msra.mxu0 0
      %903 = vmatpush.bf16.msra.mxu0 0
      %904 = vmatpush.bf16.msra.mxu0 0
      %905 = vmatpush.bf16.msra.mxu0 0
      %906 = vmatpush.bf16.msra.mxu0 0
      %907 = vmatpush.bf16.msra.mxu0 %v895
      %908 = vmatmul.bf16.gmra.mxu0 %v892
      %v909 = vpop.f32.mrf.mxu0
      %v910 = vadd.f32 0.0, %v909
      %v911 = vpop.f32.mrf.mxu0
      %912 = vdwg.mxu0
      %913 = vmatpush.bf16.msra.mxu0 0
      %914 = vmatpush.bf16.msra.mxu0 0
      %915 = vmatpush.bf16.msra.mxu0 0
      %916 = vmatpush.bf16.msra.mxu0 0
      %917 = vmatpush.bf16.msra.mxu0 0
      %918 = vmatpush.bf16.msra.mxu0 0
      %919 = vmatpush.bf16.msra.mxu0 0
      %920 = vmatpush.bf16.msra.mxu0 %v898
      %921 = vmatmul.bf16.gmra.mxu0 %v892
      %v922 = vpop.f32.mrf.mxu0
      %v923 = vadd.f32 0.0, %v922
      %v924 = vpop.f32.mrf.mxu0
      %925 = vdwg.mxu0
      %v926 = vadd.f32 %v866, %v910
      %v927 = vadd.f32 %v867, %v923
      %928 = vrot.lane.b32.xlu0 %v464, 111
      %v929 = vpop.permute.xlu0 %928
      %930 = vrot.lane.b32.xlu0 %v465, 111
      %v931 = vpop.permute.xlu0 %930
      %vm932 = vcmp.lt.s32.totalorder %v472, 111
      %v933 = vsel %vm932, %v929, %v931
      %v934 = vsel %vm932, %v931, %v929
      %s935 = scalar_lea.vmem %s1, 16
      %v936 = vld [vmem:[%s935] ss:$8 sm:$0x3]
      %v938 = vperm.slane %v936, 0
      %v939 = vperm.slane %v936, 1
      %v942 = vmul.f32 %v933, %v938
      %v943 = vmul.f32 %v934, %v939
      %v944 = vpack.c.bf16 %v942, %v942
      %v945 = vpack.c.bf16 %v943, %v943
      %946 = vst [vmem:[#allocation1] ss:$9 sm:$0xff] %v466
      %v947 = vld [vmem:[#allocation1] sm:$0xff]
      %949 = vrot.lane.b32.xlu0 %v947, 112
      %v950 = vpop.permute.xlu0 %949
      %v952 = vsel %vm510, %v950, 0
      %v955 = vsel %vm514, %v944, 0
      %v958 = vsel %vm514, %v945, 0
      %960 = vmatpush.bf16.msra.mxu0 0
      %961 = vmatpush.bf16.msra.mxu0 0
      %962 = vmatpush.bf16.msra.mxu0 0
      %963 = vmatpush.bf16.msra.mxu0 0
      %964 = vmatpush.bf16.msra.mxu0 0
      %965 = vmatpush.bf16.msra.mxu0 0
      %966 = vmatpush.bf16.msra.mxu0 0
      %967 = vmatpush.bf16.msra.mxu0 %v955
      %968 = vmatmul.bf16.gmra.mxu0 %v952
      %v969 = vpop.f32.mrf.mxu0
      %v970 = vadd.f32 0.0, %v969
      %v971 = vpop.f32.mrf.mxu0
      %972 = vdwg.mxu0
      %973 = vmatpush.bf16.msra.mxu0 0
      %974 = vmatpush.bf16.msra.mxu0 0
      %975 = vmatpush.bf16.msra.mxu0 0
      %976 = vmatpush.bf16.msra.mxu0 0
      %977 = vmatpush.bf16.msra.mxu0 0
      %978 = vmatpush.bf16.msra.mxu0 0
      %979 = vmatpush.bf16.msra.mxu0 0
      %980 = vmatpush.bf16.msra.mxu0 %v958
      %981 = vmatmul.bf16.gmra.mxu0 %v952
      %v982 = vpop.f32.mrf.mxu0
      %v983 = vadd.f32 0.0, %v982
      %v984 = vpop.f32.mrf.mxu0
      %985 = vdwg.mxu0
      %v986 = vadd.f32 %v926, %v970
      %v987 = vadd.f32 %v927, %v983
      %v988 = vld [vmem:[%s6] sm:$0x3]
      %990 = vset.pattern.permute.xlu0 0
      %991 = vperm.xlu0 %990, %v988
      %v992 = vpop.permute.xlu0 %991
      %v994 = vmul.f32 %v986, %v992
      %v995 = vmul.f32 %v987, %v992
      %v996 = vld [vmem:[%s7] sm:$0x3]
      %998 = vset.pattern.permute.xlu0 0
      %999 = vperm.xlu0 %998, %v996
      %v1000 = vpop.permute.xlu0 %999
      %v1002 = vadd.f32 %v994, %v1000
      %v1003 = vadd.f32 %v995, %v1000
      %v1004 = vmax.f32 %v1002, 0.0
      %v1005 = vmax.f32 %v1003, 0.0
      %v1006 = vpack.c.bf16 %v1005, %v1004
      %1007 = vst [vmem:[#allocation2] sm:$0x11] %v1006
      %v1008 = vld [vmem:[#allocation2] sm:$0x22]
      %v1009 = vunpack.c.l.bf16 %v1008
      %v1010 = vunpack.c.h.bf16 %v1008
      %v1013 = vrot.slane %v1009, 2
      %v1014 = vrot.slane %v1010, 2
      %v1017 = vadd.f32 %v1004, %v1013
      %v1018 = vadd.f32 %v1005, %v1014
      %s1019 = scalar_lea.vmem %s5, 1
      %v1020 = vld [vmem:[%s1019] sm:$0x1]
      %1021 = vrot.lane.b32.xlu0 %v1017, 17
      %v1022 = vpop.permute.xlu0 %1021
      %1023 = vrot.lane.b32.xlu0 %v1018, 17
      %v1024 = vpop.permute.xlu0 %1023
      %v1025 = vsel %vm473, %v1022, %v1024
      %v1026 = vsel %vm473, %v1024, %v1022
      %v1027 = vld [vmem:[%s1] ss:$8 sm:$0x3]
      %v1029 = vperm.slane %v1027, 0
      %v1030 = vperm.slane %v1027, 1
      %v1033 = vmul.f32 %v1026, %v1029
      %v1034 = vmul.f32 %v1025, %v1030
      %v1035 = vpack.c.bf16 %v1033, %v1033
      %v1036 = vpack.c.bf16 %v1034, %v1034
      %1037 = vrot.lane.b32.xlu0 %v1017, 16
      %v1038 = vpop.permute.xlu0 %1037
      %1039 = vrot.lane.b32.xlu0 %v1018, 16
      %v1040 = vpop.permute.xlu0 %1039
      %v1041 = vsel %vm490, %v1038, %v1040
      %v1042 = vsel %vm490, %v1040, %v1038
      %v1043 = vld [vmem:[%s493] ss:$8 sm:$0x3]
      %v1045 = vperm.slane %v1043, 0
      %v1046 = vperm.slane %v1043, 1
      %v1049 = vmul.f32 %v1042, %v1045
      %v1050 = vmul.f32 %v1041, %v1046
      %v1051 = vpack.c.bf16 %v1049, %v1049
      %v1052 = vpack.c.bf16 %v1050, %v1050
      %1054 = vst [vmem:[#allocation1] ss:$9 sm:$0xff] %v1020
      %v1055 = vld [vmem:[#allocation1] sm:$0xff]
      %1057 = vrot.lane.b32.xlu0 %v1055, 126
      %v1058 = vpop.permute.xlu0 %1057
      %v1060 = vsel %vm510, %v1058, 0
      %v1063 = vsel %vm514, %v1051, 0
      %v1066 = vsel %vm514, %v1052, 0
      %1068 = vmatpush.bf16.msra.mxu0 0
      %1069 = vmatpush.bf16.msra.mxu0 0
      %1070 = vmatpush.bf16.msra.mxu0 0
      %1071 = vmatpush.bf16.msra.mxu0 0
      %1072 = vmatpush.bf16.msra.mxu0 0
      %1073 = vmatpush.bf16.msra.mxu0 0
      %1074 = vmatpush.bf16.msra.mxu0 0
      %1075 = vmatpush.bf16.msra.mxu0 %v1063
      %1076 = vmatmul.bf16.gmra.mxu0 %v1060
      %v1077 = vpop.f32.mrf.mxu0
      %v1078 = vadd.f32 0.0, %v1077
      %v1079 = vpop.f32.mrf.mxu0
      %1080 = vdwg.mxu0
      %1081 = vmatpush.bf16.msra.mxu0 0
      %1082 = vmatpush.bf16.msra.mxu0 0
      %1083 = vmatpush.bf16.msra.mxu0 0
      %1084 = vmatpush.bf16.msra.mxu0 0
      %1085 = vmatpush.bf16.msra.mxu0 0
      %1086 = vmatpush.bf16.msra.mxu0 0
      %1087 = vmatpush.bf16.msra.mxu0 0
      %1088 = vmatpush.bf16.msra.mxu0 %v1066
      %1089 = vmatmul.bf16.gmra.mxu0 %v1060
      %v1090 = vpop.f32.mrf.mxu0
      %v1091 = vadd.f32 0.0, %v1090
      %v1092 = vpop.f32.mrf.mxu0
      %1093 = vdwg.mxu0
      %v1094 = vsel %vm510, %v1020, 0
      %v1097 = vsel %vm514, %v1035, 0
      %v1100 = vsel %vm514, %v1036, 0
      %1102 = vmatpush.bf16.msra.mxu0 0
      %1103 = vmatpush.bf16.msra.mxu0 0
      %1104 = vmatpush.bf16.msra.mxu0 0
      %1105 = vmatpush.bf16.msra.mxu0 0
      %1106 = vmatpush.bf16.msra.mxu0 0
      %1107 = vmatpush.bf16.msra.mxu0 0
      %1108 = vmatpush.bf16.msra.mxu0 0
      %1109 = vmatpush.bf16.msra.mxu0 %v1097
      %1110 = vmatmul.bf16.gmra.mxu0 %v1094
      %v1111 = vpop.f32.mrf.mxu0
      %v1112 = vadd.f32 %v1078, %v1111
      %v1113 = vpop.f32.mrf.mxu0
      %1114 = vdwg.mxu0
      %1115 = vmatpush.bf16.msra.mxu0 0
      %1116 = vmatpush.bf16.msra.mxu0 0
      %1117 = vmatpush.bf16.msra.mxu0 0
      %1118 = vmatpush.bf16.msra.mxu0 0
      %1119 = vmatpush.bf16.msra.mxu0 0
      %1120 = vmatpush.bf16.msra.mxu0 0
      %1121 = vmatpush.bf16.msra.mxu0 0
      %1122 = vmatpush.bf16.msra.mxu0 %v1100
      %1123 = vmatmul.bf16.gmra.mxu0 %v1094
      %v1124 = vpop.f32.mrf.mxu0
      %v1125 = vadd.f32 %v1091, %v1124
      %v1126 = vpop.f32.mrf.mxu0
      %1127 = vdwg.mxu0
      %1128 = vrot.lane.b32.xlu0 %v1017, 15
      %v1129 = vpop.permute.xlu0 %1128
      %1130 = vrot.lane.b32.xlu0 %v1018, 15
      %v1131 = vpop.permute.xlu0 %1130
      %v1132 = vsel %vm585, %v1129, %v1131
      %v1133 = vsel %vm585, %v1131, %v1129
      %v1134 = vld [vmem:[%s588] ss:$8 sm:$0x3]
      %v1136 = vperm.slane %v1134, 0
      %v1137 = vperm.slane %v1134, 1
      %v1140 = vmul.f32 %v1133, %v1136
      %v1141 = vmul.f32 %v1132, %v1137
      %v1142 = vpack.c.bf16 %v1140, %v1140
      %v1143 = vpack.c.bf16 %v1141, %v1141
      %1144 = vst [vmem:[#allocation1] ss:$9 sm:$0xff] %v1020
      %v1145 = vld [vmem:[#allocation1] sm:$0xff]
      %1147 = vrot.lane.b32.xlu0 %v1145, 124
      %v1148 = vpop.permute.xlu0 %1147
      %v1150 = vsel %vm510, %v1148, 0
      %v1153 = vsel %vm514, %v1142, 0
      %v1156 = vsel %vm514, %v1143, 0
      %1158 = vmatpush.bf16.msra.mxu0 0
      %1159 = vmatpush.bf16.msra.mxu0 0
      %1160 = vmatpush.bf16.msra.mxu0 0
      %1161 = vmatpush.bf16.msra.mxu0 0
      %1162 = vmatpush.bf16.msra.mxu0 0
      %1163 = vmatpush.bf16.msra.mxu0 0
      %1164 = vmatpush.bf16.msra.mxu0 0
      %1165 = vmatpush.bf16.msra.mxu0 %v1153
      %1166 = vmatmul.bf16.gmra.mxu0 %v1150
      %v1167 = vpop.f32.mrf.mxu0
      %v1168 = vadd.f32 0.0, %v1167
      %v1169 = vpop.f32.mrf.mxu0
      %1170 = vdwg.mxu0
      %1171 = vmatpush.bf16.msra.mxu0 0
      %1172 = vmatpush.bf16.msra.mxu0 0
      %1173 = vmatpush.bf16.msra.mxu0 0
      %1174 = vmatpush.bf16.msra.mxu0 0
      %1175 = vmatpush.bf16.msra.mxu0 0
      %1176 = vmatpush.bf16.msra.mxu0 0
      %1177 = vmatpush.bf16.msra.mxu0 0
      %1178 = vmatpush.bf16.msra.mxu0 %v1156
      %1179 = vmatmul.bf16.gmra.mxu0 %v1150
      %v1180 = vpop.f32.mrf.mxu0
      %v1181 = vadd.f32 0.0, %v1180
      %v1182 = vpop.f32.mrf.mxu0
      %1183 = vdwg.mxu0
      %v1184 = vadd.f32 %v1112, %v1168
      %v1185 = vadd.f32 %v1125, %v1181
      %1186 = vrot.lane.b32.xlu0 %v1017, 1
      %v1187 = vpop.permute.xlu0 %1186
      %1188 = vrot.lane.b32.xlu0 %v1018, 1
      %v1189 = vpop.permute.xlu0 %1188
      %v1190 = vsel %vm645, %v1187, %v1189
      %v1191 = vsel %vm645, %v1189, %v1187
      %v1192 = vld [vmem:[%s648] ss:$8 sm:$0x3]
      %v1194 = vperm.slane %v1192, 0
      %v1195 = vperm.slane %v1192, 1
      %v1198 = vmul.f32 %v1191, %v1194
      %v1199 = vmul.f32 %v1190, %v1195
      %v1200 = vpack.c.bf16 %v1198, %v1198
      %v1201 = vpack.c.bf16 %v1199, %v1199
      %1202 = vst [vmem:[#allocation1] ss:$9 sm:$0xff] %v1020
      %v1203 = vld [vmem:[#allocation1] sm:$0xff]
      %1205 = vrot.lane.b32.xlu0 %v1203, 122
      %v1206 = vpop.permute.xlu0 %1205
      %v1208 = vsel %vm510, %v1206, 0
      %v1211 = vsel %vm514, %v1200, 0
      %v1214 = vsel %vm514, %v1201, 0
      %1216 = vmatpush.bf16.msra.mxu0 0
      %1217 = vmatpush.bf16.msra.mxu0 0
      %1218 = vmatpush.bf16.msra.mxu0 0
      %1219 = vmatpush.bf16.msra.mxu0 0
      %1220 = vmatpush.bf16.msra.mxu0 0
      %1221 = vmatpush.bf16.msra.mxu0 0
      %1222 = vmatpush.bf16.msra.mxu0 0
      %1223 = vmatpush.bf16.msra.mxu0 %v1211
      %1224 = vmatmul.bf16.gmra.mxu0 %v1208
      %v1225 = vpop.f32.mrf.mxu0
      %v1226 = vadd.f32 0.0, %v1225
      %v1227 = vpop.f32.mrf.mxu0
      %1228 = vdwg.mxu0
      %1229 = vmatpush.bf16.msra.mxu0 0
      %1230 = vmatpush.bf16.msra.mxu0 0
      %1231 = vmatpush.bf16.msra.mxu0 0
      %1232 = vmatpush.bf16.msra.mxu0 0
      %1233 = vmatpush.bf16.msra.mxu0 0
      %1234 = vmatpush.bf16.msra.mxu0 0
      %1235 = vmatpush.bf16.msra.mxu0 0
      %1236 = vmatpush.bf16.msra.mxu0 %v1214
      %1237 = vmatmul.bf16.gmra.mxu0 %v1208
      %v1238 = vpop.f32.mrf.mxu0
      %v1239 = vadd.f32 0.0, %v1238
      %v1240 = vpop.f32.mrf.mxu0
      %1241 = vdwg.mxu0
      %v1242 = vadd.f32 %v1184, %v1226
      %v1243 = vadd.f32 %v1185, %v1239
      %v1244 = vpack.c.bf16 %v1017, %v1017
      %v1245 = vpack.c.bf16 %v1018, %v1018
      %1246 = vst [vmem:[#allocation1] ss:$9 sm:$0xff] %v1020
      %v1247 = vld [vmem:[#allocation1] sm:$0xff]
      %1249 = vrot.lane.b32.xlu0 %v1247, 120
      %v1250 = vpop.permute.xlu0 %1249
      %v1252 = vsel %vm510, %v1250, 0
      %v1255 = vsel %vm514, %v1244, 0
      %v1258 = vsel %vm514, %v1245, 0
      %1260 = vmatpush.bf16.msra.mxu0 0
      %1261 = vmatpush.bf16.msra.mxu0 0
      %1262 = vmatpush.bf16.msra.mxu0 0
      %1263 = vmatpush.bf16.msra.mxu0 0
      %1264 = vmatpush.bf16.msra.mxu0 0
      %1265 = vmatpush.bf16.msra.mxu0 0
      %1266 = vmatpush.bf16.msra.mxu0 0
      %1267 = vmatpush.bf16.msra.mxu0 %v1255
      %1268 = vmatmul.bf16.gmra.mxu0 %v1252
      %v1269 = vpop.f32.mrf.mxu0
      %v1270 = vadd.f32 0.0, %v1269
      %v1271 = vpop.f32.mrf.mxu0
      %1272 = vdwg.mxu0
      %1273 = vmatpush.bf16.msra.mxu0 0
      %1274 = vmatpush.bf16.msra.mxu0 0
      %1275 = vmatpush.bf16.msra.mxu0 0
      %1276 = vmatpush.bf16.msra.mxu0 0
      %1277 = vmatpush.bf16.msra.mxu0 0
      %1278 = vmatpush.bf16.msra.mxu0 0
      %1279 = vmatpush.bf16.msra.mxu0 0
      %1280 = vmatpush.bf16.msra.mxu0 %v1258
      %1281 = vmatmul.bf16.gmra.mxu0 %v1252
      %v1282 = vpop.f32.mrf.mxu0
      %v1283 = vadd.f32 0.0, %v1282
      %v1284 = vpop.f32.mrf.mxu0
      %1285 = vdwg.mxu0
      %v1286 = vadd.f32 %v1242, %v1270
      %v1287 = vadd.f32 %v1243, %v1283
      %1288 = vrot.lane.b32.xlu0 %v1017, 127
      %v1289 = vpop.permute.xlu0 %1288
      %1290 = vrot.lane.b32.xlu0 %v1018, 127
      %v1291 = vpop.permute.xlu0 %1290
      %v1292 = vsel %vm752, %v1289, %v1291
      %v1293 = vsel %vm752, %v1291, %v1289
      %v1294 = vld [vmem:[%s755] ss:$8 sm:$0x3]
      %v1296 = vperm.slane %v1294, 0
      %v1297 = vperm.slane %v1294, 1
      %v1300 = vmul.f32 %v1292, %v1296
      %v1301 = vmul.f32 %v1293, %v1297
      %v1302 = vpack.c.bf16 %v1300, %v1300
      %v1303 = vpack.c.bf16 %v1301, %v1301
      %1304 = vst [vmem:[#allocation1] ss:$9 sm:$0xff] %v1020
      %v1305 = vld [vmem:[#allocation1] sm:$0xff]
      %1307 = vrot.lane.b32.xlu0 %v1305, 118
      %v1308 = vpop.permute.xlu0 %1307
      %v1310 = vsel %vm510, %v1308, 0
      %v1313 = vsel %vm514, %v1302, 0
      %v1316 = vsel %vm514, %v1303, 0
      %1318 = vmatpush.bf16.msra.mxu0 0
      %1319 = vmatpush.bf16.msra.mxu0 0
      %1320 = vmatpush.bf16.msra.mxu0 0
      %1321 = vmatpush.bf16.msra.mxu0 0
      %1322 = vmatpush.bf16.msra.mxu0 0
      %1323 = vmatpush.bf16.msra.mxu0 0
      %1324 = vmatpush.bf16.msra.mxu0 0
      %1325 = vmatpush.bf16.msra.mxu0 %v1313
      %1326 = vmatmul.bf16.gmra.mxu0 %v1310
      %v1327 = vpop.f32.mrf.mxu0
      %v1328 = vadd.f32 0.0, %v1327
      %v1329 = vpop.f32.mrf.mxu0
      %1330 = vdwg.mxu0
      %1331 = vmatpush.bf16.msra.mxu0 0
      %1332 = vmatpush.bf16.msra.mxu0 0
      %1333 = vmatpush.bf16.msra.mxu0 0
      %1334 = vmatpush.bf16.msra.mxu0 0
      %1335 = vmatpush.bf16.msra.mxu0 0
      %1336 = vmatpush.bf16.msra.mxu0 0
      %1337 = vmatpush.bf16.msra.mxu0 0
      %1338 = vmatpush.bf16.msra.mxu0 %v1316
      %1339 = vmatmul.bf16.gmra.mxu0 %v1310
      %v1340 = vpop.f32.mrf.mxu0
      %v1341 = vadd.f32 0.0, %v1340
      %v1342 = vpop.f32.mrf.mxu0
      %1343 = vdwg.mxu0
      %v1344 = vadd.f32 %v1286, %v1328
      %v1345 = vadd.f32 %v1287, %v1341
      %1346 = vrot.lane.b32.xlu0 %v1017, 113
      %v1347 = vpop.permute.xlu0 %1346
      %1348 = vrot.lane.b32.xlu0 %v1018, 113
      %v1349 = vpop.permute.xlu0 %1348
      %v1350 = vsel %vm812, %v1347, %v1349
      %v1351 = vsel %vm812, %v1349, %v1347
      %v1352 = vld [vmem:[%s815] ss:$8 sm:$0x3]
      %v1354 = vperm.slane %v1352, 0
      %v1355 = vperm.slane %v1352, 1
      %v1358 = vmul.f32 %v1350, %v1354
      %v1359 = vmul.f32 %v1351, %v1355
      %v1360 = vpack.c.bf16 %v1358, %v1358
      %v1361 = vpack.c.bf16 %v1359, %v1359
      %1362 = vst [vmem:[#allocation1] ss:$9 sm:$0xff] %v1020
      %v1363 = vld [vmem:[#allocation1] sm:$0xff]
      %1365 = vrot.lane.b32.xlu0 %v1363, 116
      %v1366 = vpop.permute.xlu0 %1365
      %v1368 = vsel %vm510, %v1366, 0
      %v1371 = vsel %vm514, %v1360, 0
      %v1374 = vsel %vm514, %v1361, 0
      %1376 = vmatpush.bf16.msra.mxu0 0
      %1377 = vmatpush.bf16.msra.mxu0 0
      %1378 = vmatpush.bf16.msra.mxu0 0
      %1379 = vmatpush.bf16.msra.mxu0 0
      %1380 = vmatpush.bf16.msra.mxu0 0
      %1381 = vmatpush.bf16.msra.mxu0 0
      %1382 = vmatpush.bf16.msra.mxu0 0
      %1383 = vmatpush.bf16.msra.mxu0 %v1371
      %1384 = vmatmul.bf16.gmra.mxu0 %v1368
      %v1385 = vpop.f32.mrf.mxu0
      %v1386 = vadd.f32 0.0, %v1385
      %v1387 = vpop.f32.mrf.mxu0
      %1388 = vdwg.mxu0
      %1389 = vmatpush.bf16.msra.mxu0 0
      %1390 = vmatpush.bf16.msra.mxu0 0
      %1391 = vmatpush.bf16.msra.mxu0 0
      %1392 = vmatpush.bf16.msra.mxu0 0
      %1393 = vmatpush.bf16.msra.mxu0 0
      %1394 = vmatpush.bf16.msra.mxu0 0
      %1395 = vmatpush.bf16.msra.mxu0 0
      %1396 = vmatpush.bf16.msra.mxu0 %v1374
      %1397 = vmatmul.bf16.gmra.mxu0 %v1368
      %v1398 = vpop.f32.mrf.mxu0
      %v1399 = vadd.f32 0.0, %v1398
      %v1400 = vpop.f32.mrf.mxu0
      %1401 = vdwg.mxu0
      %v1402 = vadd.f32 %v1344, %v1386
      %v1403 = vadd.f32 %v1345, %v1399
      %1404 = vrot.lane.b32.xlu0 %v1017, 112
      %v1405 = vpop.permute.xlu0 %1404
      %1406 = vrot.lane.b32.xlu0 %v1018, 112
      %v1407 = vpop.permute.xlu0 %1406
      %v1408 = vsel %vm872, %v1405, %v1407
      %v1409 = vsel %vm872, %v1407, %v1405
      %v1410 = vld [vmem:[%s875] ss:$8 sm:$0x3]
      %v1412 = vperm.slane %v1410, 0
      %v1413 = vperm.slane %v1410, 1
      %v1416 = vmul.f32 %v1408, %v1412
      %v1417 = vmul.f32 %v1409, %v1413
      %v1418 = vpack.c.bf16 %v1416, %v1416
      %v1419 = vpack.c.bf16 %v1417, %v1417
      %1420 = vst [vmem:[#allocation1] ss:$9 sm:$0xff] %v1020
      %v1421 = vld [vmem:[#allocation1] sm:$0xff]
      %1423 = vrot.lane.b32.xlu0 %v1421, 114
      %v1424 = vpop.permute.xlu0 %1423
      %v1426 = vsel %vm510, %v1424, 0
      %v1429 = vsel %vm514, %v1418, 0
      %v1432 = vsel %vm514, %v1419, 0
      %1434 = vmatpush.bf16.msra.mxu0 0
      %1435 = vmatpush.bf16.msra.mxu0 0
      %1436 = vmatpush.bf16.msra.mxu0 0
      %1437 = vmatpush.bf16.msra.mxu0 0
      %1438 = vmatpush.bf16.msra.mxu0 0
      %1439 = vmatpush.bf16.msra.mxu0 0
      %1440 = vmatpush.bf16.msra.mxu0 0
      %1441 = vmatpush.bf16.msra.mxu0 %v1429
      %1442 = vmatmul.bf16.gmra.mxu0 %v1426
      %v1443 = vpop.f32.mrf.mxu0
      %v1444 = vadd.f32 0.0, %v1443
      %v1445 = vpop.f32.mrf.mxu0
      %1446 = vdwg.mxu0
      %1447 = vmatpush.bf16.msra.mxu0 0
      %1448 = vmatpush.bf16.msra.mxu0 0
      %1449 = vmatpush.bf16.msra.mxu0 0
      %1450 = vmatpush.bf16.msra.mxu0 0
      %1451 = vmatpush.bf16.msra.mxu0 0
      %1452 = vmatpush.bf16.msra.mxu0 0
      %1453 = vmatpush.bf16.msra.mxu0 0
      %1454 = vmatpush.bf16.msra.mxu0 %v1432
      %1455 = vmatmul.bf16.gmra.mxu0 %v1426
      %v1456 = vpop.f32.mrf.mxu0
      %v1457 = vadd.f32 0.0, %v1456
      %v1458 = vpop.f32.mrf.mxu0
      %1459 = vdwg.mxu0
      %v1460 = vadd.f32 %v1402, %v1444
      %v1461 = vadd.f32 %v1403, %v1457
      %1462 = vrot.lane.b32.xlu0 %v1017, 111
      %v1463 = vpop.permute.xlu0 %1462
      %1464 = vrot.lane.b32.xlu0 %v1018, 111
      %v1465 = vpop.permute.xlu0 %1464
      %v1466 = vsel %vm932, %v1463, %v1465
      %v1467 = vsel %vm932, %v1465, %v1463
      %v1468 = vld [vmem:[%s935] ss:$8 sm:$0x3]
      %v1470 = vperm.slane %v1468, 0
      %v1471 = vperm.slane %v1468, 1
      %v1474 = vmul.f32 %v1466, %v1470
      %v1475 = vmul.f32 %v1467, %v1471
      %v1476 = vpack.c.bf16 %v1474, %v1474
      %v1477 = vpack.c.bf16 %v1475, %v1475
      %1478 = vst [vmem:[#allocation1] ss:$9 sm:$0xff] %v1020
      %v1479 = vld [vmem:[#allocation1] sm:$0xff]
      %1481 = vrot.lane.b32.xlu0 %v1479, 112
      %v1482 = vpop.permute.xlu0 %1481
      %v1484 = vsel %vm510, %v1482, 0
      %v1487 = vsel %vm514, %v1476, 0
      %v1490 = vsel %vm514, %v1477, 0
      %1492 = vmatpush.bf16.msra.mxu0 0
      %1493 = vmatpush.bf16.msra.mxu0 0
      %1494 = vmatpush.bf16.msra.mxu0 0
      %1495 = vmatpush.bf16.msra.mxu0 0
      %1496 = vmatpush.bf16.msra.mxu0 0
      %1497 = vmatpush.bf16.msra.mxu0 0
      %1498 = vmatpush.bf16.msra.mxu0 0
      %1499 = vmatpush.bf16.msra.mxu0 %v1487
      %1500 = vmatmul.bf16.gmra.mxu0 %v1484
      %v1501 = vpop.f32.mrf.mxu0
      %v1502 = vadd.f32 0.0, %v1501
      %v1503 = vpop.f32.mrf.mxu0
      %1504 = vdwg.mxu0
      %1505 = vmatpush.bf16.msra.mxu0 0
      %1506 = vmatpush.bf16.msra.mxu0 0
      %1507 = vmatpush.bf16.msra.mxu0 0
      %1508 = vmatpush.bf16.msra.mxu0 0
      %1509 = vmatpush.bf16.msra.mxu0 0
      %1510 = vmatpush.bf16.msra.mxu0 0
      %1511 = vmatpush.bf16.msra.mxu0 0
      %1512 = vmatpush.bf16.msra.mxu0 %v1490
      %1513 = vmatmul.bf16.gmra.mxu0 %v1484
      %v1514 = vpop.f32.mrf.mxu0
      %v1515 = vadd.f32 0.0, %v1514
      %v1516 = vpop.f32.mrf.mxu0
      %1517 = vdwg.mxu0
      %v1518 = vadd.f32 %v1460, %v1502
      %v1519 = vadd.f32 %v1461, %v1515
      %s1520 = scalar_lea.vmem %s6, 2
      %v1521 = vld [vmem:[%s1520] sm:$0x3]
      %1523 = vset.pattern.permute.xlu0 0
      %1524 = vperm.xlu0 %1523, %v1521
      %v1525 = vpop.permute.xlu0 %1524
      %v1527 = vmul.f32 %v1518, %v1525
      %v1528 = vmul.f32 %v1519, %v1525
      %s1529 = scalar_lea.vmem %s7, 2
      %v1530 = vld [vmem:[%s1529] sm:$0x3]
      %1532 = vset.pattern.permute.xlu0 0
      %1533 = vperm.xlu0 %1532, %v1530
      %v1534 = vpop.permute.xlu0 %1533
      %v1536 = vadd.f32 %v1527, %v1534
      %v1537 = vadd.f32 %v1528, %v1534
      %v1538 = vmax.f32 %v1536, 0.0
      %v1539 = vmax.f32 %v1537, 0.0
      %v1540 = vpack.c.bf16 %v1539, %v1538
      %v1542 = vrot.slane %v1540, 7
      %1544 = vst [vmem:[#allocation2] sm:$0x22] %v1542
      %v1545 = vld [vmem:[#allocation2] sm:$0x44]
      %v1546 = vunpack.c.l.bf16 %v1545
      %v1547 = vunpack.c.h.bf16 %v1545
      %v1550 = vrot.slane %v1546, 4
      %v1551 = vrot.slane %v1547, 4
      %v1554 = vadd.f32 %v1538, %v1550
      %v1555 = vadd.f32 %v1539, %v1551
      %s1556 = scalar_lea.vmem %s5, 2
      %v1557 = vld [vmem:[%s1556] sm:$0x1]
      %1558 = vrot.lane.b32.xlu0 %v1554, 17
      %v1559 = vpop.permute.xlu0 %1558
      %1560 = vrot.lane.b32.xlu0 %v1555, 17
      %v1561 = vpop.permute.xlu0 %1560
      %v1562 = vsel %vm473, %v1559, %v1561
      %v1563 = vsel %vm473, %v1561, %v1559
      %v1564 = vld [vmem:[%s1] ss:$8 sm:$0x3]
      %v1566 = vperm.slane %v1564, 0
      %v1567 = vperm.slane %v1564, 1
      %v1570 = vmul.f32 %v1563, %v1566
      %v1571 = vmul.f32 %v1562, %v1567
      %v1572 = vpack.c.bf16 %v1570, %v1570
      %v1573 = vpack.c.bf16 %v1571, %v1571
      %1574 = vrot.lane.b32.xlu0 %v1554, 16
      %v1575 = vpop.permute.xlu0 %1574
      %1576 = vrot.lane.b32.xlu0 %v1555, 16
      %v1577 = vpop.permute.xlu0 %1576
      %v1578 = vsel %vm490, %v1575, %v1577
      %v1579 = vsel %vm490, %v1577, %v1575
      %v1580 = vld [vmem:[%s493] ss:$8 sm:$0x3]
      %v1582 = vperm.slane %v1580, 0
      %v1583 = vperm.slane %v1580, 1
      %v1586 = vmul.f32 %v1579, %v1582
      %v1587 = vmul.f32 %v1578, %v1583
      %v1588 = vpack.c.bf16 %v1586, %v1586
      %v1589 = vpack.c.bf16 %v1587, %v1587
      %1591 = vst [vmem:[#allocation1] ss:$9 sm:$0xff] %v1557
      %v1592 = vld [vmem:[#allocation1] sm:$0xff]
      %1594 = vrot.lane.b32.xlu0 %v1592, 126
      %v1595 = vpop.permute.xlu0 %1594
      %v1597 = vsel %vm510, %v1595, 0
      %v1600 = vsel %vm514, %v1588, 0
      %v1603 = vsel %vm514, %v1589, 0
      %1605 = vmatpush.bf16.msra.mxu0 0
      %1606 = vmatpush.bf16.msra.mxu0 0
      %1607 = vmatpush.bf16.msra.mxu0 0
      %1608 = vmatpush.bf16.msra.mxu0 0
      %1609 = vmatpush.bf16.msra.mxu0 0
      %1610 = vmatpush.bf16.msra.mxu0 0
      %1611 = vmatpush.bf16.msra.mxu0 0
      %1612 = vmatpush.bf16.msra.mxu0 %v1600
      %1613 = vmatmul.bf16.gmra.mxu0 %v1597
      %v1614 = vpop.f32.mrf.mxu0
      %v1615 = vadd.f32 0.0, %v1614
      %v1616 = vpop.f32.mrf.mxu0
      %1617 = vdwg.mxu0
      %1618 = vmatpush.bf16.msra.mxu0 0
      %1619 = vmatpush.bf16.msra.mxu0 0
      %1620 = vmatpush.bf16.msra.mxu0 0
      %1621 = vmatpush.bf16.msra.mxu0 0
      %1622 = vmatpush.bf16.msra.mxu0 0
      %1623 = vmatpush.bf16.msra.mxu0 0
      %1624 = vmatpush.bf16.msra.mxu0 0
      %1625 = vmatpush.bf16.msra.mxu0 %v1603
      %1626 = vmatmul.bf16.gmra.mxu0 %v1597
      %v1627 = vpop.f32.mrf.mxu0
      %v1628 = vadd.f32 0.0, %v1627
      %v1629 = vpop.f32.mrf.mxu0
      %1630 = vdwg.mxu0
      %v1631 = vsel %vm510, %v1557, 0
      %v1634 = vsel %vm514, %v1572, 0
      %v1637 = vsel %vm514, %v1573, 0
      %1639 = vmatpush.bf16.msra.mxu0 0
      %1640 = vmatpush.bf16.msra.mxu0 0
      %1641 = vmatpush.bf16.msra.mxu0 0
      %1642 = vmatpush.bf16.msra.mxu0 0
      %1643 = vmatpush.bf16.msra.mxu0 0
      %1644 = vmatpush.bf16.msra.mxu0 0
      %1645 = vmatpush.bf16.msra.mxu0 0
      %1646 = vmatpush.bf16.msra.mxu0 %v1634
      %1647 = vmatmul.bf16.gmra.mxu0 %v1631
      %v1648 = vpop.f32.mrf.mxu0
      %v1649 = vadd.f32 %v1615, %v1648
      %v1650 = vpop.f32.mrf.mxu0
      %1651 = vdwg.mxu0
      %1652 = vmatpush.bf16.msra.mxu0 0
      %1653 = vmatpush.bf16.msra.mxu0 0
      %1654 = vmatpush.bf16.msra.mxu0 0
      %1655 = vmatpush.bf16.msra.mxu0 0
      %1656 = vmatpush.bf16.msra.mxu0 0
      %1657 = vmatpush.bf16.msra.mxu0 0
      %1658 = vmatpush.bf16.msra.mxu0 0
      %1659 = vmatpush.bf16.msra.mxu0 %v1637
      %1660 = vmatmul.bf16.gmra.mxu0 %v1631
      %v1661 = vpop.f32.mrf.mxu0
      %v1662 = vadd.f32 %v1628, %v1661
      %v1663 = vpop.f32.mrf.mxu0
      %1664 = vdwg.mxu0
      %1665 = vrot.lane.b32.xlu0 %v1554, 15
      %v1666 = vpop.permute.xlu0 %1665
      %1667 = vrot.lane.b32.xlu0 %v1555, 15
      %v1668 = vpop.permute.xlu0 %1667
      %v1669 = vsel %vm585, %v1666, %v1668
      %v1670 = vsel %vm585, %v1668, %v1666
      %v1671 = vld [vmem:[%s588] ss:$8 sm:$0x3]
      %v1673 = vperm.slane %v1671, 0
      %v1674 = vperm.slane %v1671, 1
      %v1677 = vmul.f32 %v1670, %v1673
      %v1678 = vmul.f32 %v1669, %v1674
      %v1679 = vpack.c.bf16 %v1677, %v1677
      %v1680 = vpack.c.bf16 %v1678, %v1678
      %1681 = vst [vmem:[#allocation1] ss:$9 sm:$0xff] %v1557
      %v1682 = vld [vmem:[#allocation1] sm:$0xff]
      %1684 = vrot.lane.b32.xlu0 %v1682, 124
      %v1685 = vpop.permute.xlu0 %1684
      %v1687 = vsel %vm510, %v1685, 0
      %v1690 = vsel %vm514, %v1679, 0
      %v1693 = vsel %vm514, %v1680, 0
      %1695 = vmatpush.bf16.msra.mxu0 0
      %1696 = vmatpush.bf16.msra.mxu0 0
      %1697 = vmatpush.bf16.msra.mxu0 0
      %1698 = vmatpush.bf16.msra.mxu0 0
      %1699 = vmatpush.bf16.msra.mxu0 0
      %1700 = vmatpush.bf16.msra.mxu0 0
      %1701 = vmatpush.bf16.msra.mxu0 0
      %1702 = vmatpush.bf16.msra.mxu0 %v1690
      %1703 = vmatmul.bf16.gmra.mxu0 %v1687
      %v1704 = vpop.f32.mrf.mxu0
      %v1705 = vadd.f32 0.0, %v1704
      %v1706 = vpop.f32.mrf.mxu0
      %1707 = vdwg.mxu0
      %1708 = vmatpush.bf16.msra.mxu0 0
      %1709 = vmatpush.bf16.msra.mxu0 0
      %1710 = vmatpush.bf16.msra.mxu0 0
      %1711 = vmatpush.bf16.msra.mxu0 0
      %1712 = vmatpush.bf16.msra.mxu0 0
      %1713 = vmatpush.bf16.msra.mxu0 0
      %1714 = vmatpush.bf16.msra.mxu0 0
      %1715 = vmatpush.bf16.msra.mxu0 %v1693
      %1716 = vmatmul.bf16.gmra.mxu0 %v1687
      %v1717 = vpop.f32.mrf.mxu0
      %v1718 = vadd.f32 0.0, %v1717
      %v1719 = vpop.f32.mrf.mxu0
      %1720 = vdwg.mxu0
      %v1721 = vadd.f32 %v1649, %v1705
      %v1722 = vadd.f32 %v1662, %v1718
      %1723 = vrot.lane.b32.xlu0 %v1554, 1
      %v1724 = vpop.permute.xlu0 %1723
      %1725 = vrot.lane.b32.xlu0 %v1555, 1
      %v1726 = vpop.permute.xlu0 %1725
      %v1727 = vsel %vm645, %v1724, %v1726
      %v1728 = vsel %vm645, %v1726, %v1724
      %v1729 = vld [vmem:[%s648] ss:$8 sm:$0x3]
      %v1731 = vperm.slane %v1729, 0
      %v1732 = vperm.slane %v1729, 1
      %v1735 = vmul.f32 %v1728, %v1731
      %v1736 = vmul.f32 %v1727, %v1732
      %v1737 = vpack.c.bf16 %v1735, %v1735
      %v1738 = vpack.c.bf16 %v1736, %v1736
      %1739 = vst [vmem:[#allocation1] ss:$9 sm:$0xff] %v1557
      %v1740 = vld [vmem:[#allocation1] sm:$0xff]
      %1742 = vrot.lane.b32.xlu0 %v1740, 122
      %v1743 = vpop.permute.xlu0 %1742
      %v1745 = vsel %vm510, %v1743, 0
      %v1748 = vsel %vm514, %v1737, 0
      %v1751 = vsel %vm514, %v1738, 0
      %1753 = vmatpush.bf16.msra.mxu0 0
      %1754 = vmatpush.bf16.msra.mxu0 0
      %1755 = vmatpush.bf16.msra.mxu0 0
      %1756 = vmatpush.bf16.msra.mxu0 0
      %1757 = vmatpush.bf16.msra.mxu0 0
      %1758 = vmatpush.bf16.msra.mxu0 0
      %1759 = vmatpush.bf16.msra.mxu0 0
      %1760 = vmatpush.bf16.msra.mxu0 %v1748
      %1761 = vmatmul.bf16.gmra.mxu0 %v1745
      %v1762 = vpop.f32.mrf.mxu0
      %v1763 = vadd.f32 0.0, %v1762
      %v1764 = vpop.f32.mrf.mxu0
      %1765 = vdwg.mxu0
      %1766 = vmatpush.bf16.msra.mxu0 0
      %1767 = vmatpush.bf16.msra.mxu0 0
      %1768 = vmatpush.bf16.msra.mxu0 0
      %1769 = vmatpush.bf16.msra.mxu0 0
      %1770 = vmatpush.bf16.msra.mxu0 0
      %1771 = vmatpush.bf16.msra.mxu0 0
      %1772 = vmatpush.bf16.msra.mxu0 0
      %1773 = vmatpush.bf16.msra.mxu0 %v1751
      %1774 = vmatmul.bf16.gmra.mxu0 %v1745
      %v1775 = vpop.f32.mrf.mxu0
      %v1776 = vadd.f32 0.0, %v1775
      %v1777 = vpop.f32.mrf.mxu0
      %1778 = vdwg.mxu0
      %v1779 = vadd.f32 %v1721, %v1763
      %v1780 = vadd.f32 %v1722, %v1776
      %v1781 = vpack.c.bf16 %v1554, %v1554
      %v1782 = vpack.c.bf16 %v1555, %v1555
      %1783 = vst [vmem:[#allocation1] ss:$9 sm:$0xff] %v1557
      %v1784 = vld [vmem:[#allocation1] sm:$0xff]
      %1786 = vrot.lane.b32.xlu0 %v1784, 120
      %v1787 = vpop.permute.xlu0 %1786
      %v1789 = vsel %vm510, %v1787, 0
      %v1792 = vsel %vm514, %v1781, 0
      %v1795 = vsel %vm514, %v1782, 0
      %1797 = vmatpush.bf16.msra.mxu0 0
      %1798 = vmatpush.bf16.msra.mxu0 0
      %1799 = vmatpush.bf16.msra.mxu0 0
      %1800 = vmatpush.bf16.msra.mxu0 0
      %1801 = vmatpush.bf16.msra.mxu0 0
      %1802 = vmatpush.bf16.msra.mxu0 0
      %1803 = vmatpush.bf16.msra.mxu0 0
      %1804 = vmatpush.bf16.msra.mxu0 %v1792
      %1805 = vmatmul.bf16.gmra.mxu0 %v1789
      %v1806 = vpop.f32.mrf.mxu0
      %v1807 = vadd.f32 0.0, %v1806
      %v1808 = vpop.f32.mrf.mxu0
      %1809 = vdwg.mxu0
      %1810 = vmatpush.bf16.msra.mxu0 0
      %1811 = vmatpush.bf16.msra.mxu0 0
      %1812 = vmatpush.bf16.msra.mxu0 0
      %1813 = vmatpush.bf16.msra.mxu0 0
      %1814 = vmatpush.bf16.msra.mxu0 0
      %1815 = vmatpush.bf16.msra.mxu0 0
      %1816 = vmatpush.bf16.msra.mxu0 0
      %1817 = vmatpush.bf16.msra.mxu0 %v1795
      %1818 = vmatmul.bf16.gmra.mxu0 %v1789
      %v1819 = vpop.f32.mrf.mxu0
      %v1820 = vadd.f32 0.0, %v1819
      %v1821 = vpop.f32.mrf.mxu0
      %1822 = vdwg.mxu0
      %v1823 = vadd.f32 %v1779, %v1807
      %v1824 = vadd.f32 %v1780, %v1820
      %1825 = vrot.lane.b32.xlu0 %v1554, 127
      %v1826 = vpop.permute.xlu0 %1825
      %1827 = vrot.lane.b32.xlu0 %v1555, 127
      %v1828 = vpop.permute.xlu0 %1827
      %v1829 = vsel %vm752, %v1826, %v1828
      %v1830 = vsel %vm752, %v1828, %v1826
      %v1831 = vld [vmem:[%s755] ss:$8 sm:$0x3]
      %v1833 = vperm.slane %v1831, 0
      %v1834 = vperm.slane %v1831, 1
      %v1837 = vmul.f32 %v1829, %v1833
      %v1838 = vmul.f32 %v1830, %v1834
      %v1839 = vpack.c.bf16 %v1837, %v1837
      %v1840 = vpack.c.bf16 %v1838, %v1838
      %1841 = vst [vmem:[#allocation1] ss:$9 sm:$0xff] %v1557
      %v1842 = vld [vmem:[#allocation1] sm:$0xff]
      %1844 = vrot.lane.b32.xlu0 %v1842, 118
      %v1845 = vpop.permute.xlu0 %1844
      %v1847 = vsel %vm510, %v1845, 0
      %v1850 = vsel %vm514, %v1839, 0
      %v1853 = vsel %vm514, %v1840, 0
      %1855 = vmatpush.bf16.msra.mxu0 0
      %1856 = vmatpush.bf16.msra.mxu0 0
      %1857 = vmatpush.bf16.msra.mxu0 0
      %1858 = vmatpush.bf16.msra.mxu0 0
      %1859 = vmatpush.bf16.msra.mxu0 0
      %1860 = vmatpush.bf16.msra.mxu0 0
      %1861 = vmatpush.bf16.msra.mxu0 0
      %1862 = vmatpush.bf16.msra.mxu0 %v1850
      %1863 = vmatmul.bf16.gmra.mxu0 %v1847
      %v1864 = vpop.f32.mrf.mxu0
      %v1865 = vadd.f32 0.0, %v1864
      %v1866 = vpop.f32.mrf.mxu0
      %1867 = vdwg.mxu0
      %1868 = vmatpush.bf16.msra.mxu0 0
      %1869 = vmatpush.bf16.msra.mxu0 0
      %1870 = vmatpush.bf16.msra.mxu0 0
      %1871 = vmatpush.bf16.msra.mxu0 0
      %1872 = vmatpush.bf16.msra.mxu0 0
      %1873 = vmatpush.bf16.msra.mxu0 0
      %1874 = vmatpush.bf16.msra.mxu0 0
      %1875 = vmatpush.bf16.msra.mxu0 %v1853
      %1876 = vmatmul.bf16.gmra.mxu0 %v1847
      %v1877 = vpop.f32.mrf.mxu0
      %v1878 = vadd.f32 0.0, %v1877
      %v1879 = vpop.f32.mrf.mxu0
      %1880 = vdwg.mxu0
      %v1881 = vadd.f32 %v1823, %v1865
      %v1882 = vadd.f32 %v1824, %v1878
      %1883 = vrot.lane.b32.xlu0 %v1554, 113
      %v1884 = vpop.permute.xlu0 %1883
      %1885 = vrot.lane.b32.xlu0 %v1555, 113
      %v1886 = vpop.permute.xlu0 %1885
      %v1887 = vsel %vm812, %v1884, %v1886
      %v1888 = vsel %vm812, %v1886, %v1884
      %v1889 = vld [vmem:[%s815] ss:$8 sm:$0x3]
      %v1891 = vperm.slane %v1889, 0
      %v1892 = vperm.slane %v1889, 1
      %v1895 = vmul.f32 %v1887, %v1891
      %v1896 = vmul.f32 %v1888, %v1892
      %v1897 = vpack.c.bf16 %v1895, %v1895
      %v1898 = vpack.c.bf16 %v1896, %v1896
      %1899 = vst [vmem:[#allocation1] ss:$9 sm:$0xff] %v1557
      %v1900 = vld [vmem:[#allocation1] sm:$0xff]
      %1902 = vrot.lane.b32.xlu0 %v1900, 116
      %v1903 = vpop.permute.xlu0 %1902
      %v1905 = vsel %vm510, %v1903, 0
      %v1908 = vsel %vm514, %v1897, 0
      %v1911 = vsel %vm514, %v1898, 0
      %1913 = vmatpush.bf16.msra.mxu0 0
      %1914 = vmatpush.bf16.msra.mxu0 0
      %1915 = vmatpush.bf16.msra.mxu0 0
      %1916 = vmatpush.bf16.msra.mxu0 0
      %1917 = vmatpush.bf16.msra.mxu0 0
      %1918 = vmatpush.bf16.msra.mxu0 0
      %1919 = vmatpush.bf16.msra.mxu0 0
      %1920 = vmatpush.bf16.msra.mxu0 %v1908
      %1921 = vmatmul.bf16.gmra.mxu0 %v1905
      %v1922 = vpop.f32.mrf.mxu0
      %v1923 = vadd.f32 0.0, %v1922
      %v1924 = vpop.f32.mrf.mxu0
      %1925 = vdwg.mxu0
      %1926 = vmatpush.bf16.msra.mxu0 0
      %1927 = vmatpush.bf16.msra.mxu0 0
      %1928 = vmatpush.bf16.msra.mxu0 0
      %1929 = vmatpush.bf16.msra.mxu0 0
      %1930 = vmatpush.bf16.msra.mxu0 0
      %1931 = vmatpush.bf16.msra.mxu0 0
      %1932 = vmatpush.bf16.msra.mxu0 0
      %1933 = vmatpush.bf16.msra.mxu0 %v1911
      %1934 = vmatmul.bf16.gmra.mxu0 %v1905
      %v1935 = vpop.f32.mrf.mxu0
      %v1936 = vadd.f32 0.0, %v1935
      %v1937 = vpop.f32.mrf.mxu0
      %1938 = vdwg.mxu0
      %v1939 = vadd.f32 %v1881, %v1923
      %v1940 = vadd.f32 %v1882, %v1936
      %1941 = vrot.lane.b32.xlu0 %v1554, 112
      %v1942 = vpop.permute.xlu0 %1941
      %1943 = vrot.lane.b32.xlu0 %v1555, 112
      %v1944 = vpop.permute.xlu0 %1943
      %v1945 = vsel %vm872, %v1942, %v1944
      %v1946 = vsel %vm872, %v1944, %v1942
      %v1947 = vld [vmem:[%s875] ss:$8 sm:$0x3]
      %v1949 = vperm.slane %v1947, 0
      %v1950 = vperm.slane %v1947, 1
      %v1953 = vmul.f32 %v1945, %v1949
      %v1954 = vmul.f32 %v1946, %v1950
      %v1955 = vpack.c.bf16 %v1953, %v1953
      %v1956 = vpack.c.bf16 %v1954, %v1954
      %1957 = vst [vmem:[#allocation1] ss:$9 sm:$0xff] %v1557
      %v1958 = vld [vmem:[#allocation1] sm:$0xff]
      %1960 = vrot.lane.b32.xlu0 %v1958, 114
      %v1961 = vpop.permute.xlu0 %1960
      %v1963 = vsel %vm510, %v1961, 0
      %v1966 = vsel %vm514, %v1955, 0
      %v1969 = vsel %vm514, %v1956, 0
      %1971 = vmatpush.bf16.msra.mxu0 0
      %1972 = vmatpush.bf16.msra.mxu0 0
      %1973 = vmatpush.bf16.msra.mxu0 0
      %1974 = vmatpush.bf16.msra.mxu0 0
      %1975 = vmatpush.bf16.msra.mxu0 0
      %1976 = vmatpush.bf16.msra.mxu0 0
      %1977 = vmatpush.bf16.msra.mxu0 0
      %1978 = vmatpush.bf16.msra.mxu0 %v1966
      %1979 = vmatmul.bf16.gmra.mxu0 %v1963
      %v1980 = vpop.f32.mrf.mxu0
      %v1981 = vadd.f32 0.0, %v1980
      %v1982 = vpop.f32.mrf.mxu0
      %1983 = vdwg.mxu0
      %1984 = vmatpush.bf16.msra.mxu0 0
      %1985 = vmatpush.bf16.msra.mxu0 0
      %1986 = vmatpush.bf16.msra.mxu0 0
      %1987 = vmatpush.bf16.msra.mxu0 0
      %1988 = vmatpush.bf16.msra.mxu0 0
      %1989 = vmatpush.bf16.msra.mxu0 0
      %1990 = vmatpush.bf16.msra.mxu0 0
      %1991 = vmatpush.bf16.msra.mxu0 %v1969
      %1992 = vmatmul.bf16.gmra.mxu0 %v1963
      %v1993 = vpop.f32.mrf.mxu0
      %v1994 = vadd.f32 0.0, %v1993
      %v1995 = vpop.f32.mrf.mxu0
      %1996 = vdwg.mxu0
      %v1997 = vadd.f32 %v1939, %v1981
      %v1998 = vadd.f32 %v1940, %v1994
      %1999 = vrot.lane.b32.xlu0 %v1554, 111
      %v2000 = vpop.permute.xlu0 %1999
      %2001 = vrot.lane.b32.xlu0 %v1555, 111
      %v2002 = vpop.permute.xlu0 %2001
      %v2003 = vsel %vm932, %v2000, %v2002
      %v2004 = vsel %vm932, %v2002, %v2000
      %v2005 = vld [vmem:[%s935] ss:$8 sm:$0x3]
      %v2007 = vperm.slane %v2005, 0
      %v2008 = vperm.slane %v2005, 1
      %v2011 = vmul.f32 %v2003, %v2007
      %v2012 = vmul.f32 %v2004, %v2008
      %v2013 = vpack.c.bf16 %v2011, %v2011
      %v2014 = vpack.c.bf16 %v2012, %v2012
      %2015 = vst [vmem:[#allocation1] ss:$9 sm:$0xff] %v1557
      %v2016 = vld [vmem:[#allocation1] sm:$0xff]
      %2018 = vrot.lane.b32.xlu0 %v2016, 112
      %v2019 = vpop.permute.xlu0 %2018
      %v2021 = vsel %vm510, %v2019, 0
      %v2024 = vsel %vm514, %v2013, 0
      %v2027 = vsel %vm514, %v2014, 0
      %2029 = vmatpush.bf16.msra.mxu0 0
      %2030 = vmatpush.bf16.msra.mxu0 0
      %2031 = vmatpush.bf16.msra.mxu0 0
      %2032 = vmatpush.bf16.msra.mxu0 0
      %2033 = vmatpush.bf16.msra.mxu0 0
      %2034 = vmatpush.bf16.msra.mxu0 0
      %2035 = vmatpush.bf16.msra.mxu0 0
      %2036 = vmatpush.bf16.msra.mxu0 %v2024
      %2037 = vmatmul.bf16.gmra.mxu0 %v2021
      %v2038 = vpop.f32.mrf.mxu0
      %v2039 = vadd.f32 0.0, %v2038
      %v2040 = vpop.f32.mrf.mxu0
      %2041 = vdwg.mxu0
      %2042 = vmatpush.bf16.msra.mxu0 0
      %2043 = vmatpush.bf16.msra.mxu0 0
      %2044 = vmatpush.bf16.msra.mxu0 0
      %2045 = vmatpush.bf16.msra.mxu0 0
      %2046 = vmatpush.bf16.msra.mxu0 0
      %2047 = vmatpush.bf16.msra.mxu0 0
      %2048 = vmatpush.bf16.msra.mxu0 0
      %2049 = vmatpush.bf16.msra.mxu0 %v2027
      %2050 = vmatmul.bf16.gmra.mxu0 %v2021
      %v2051 = vpop.f32.mrf.mxu0
      %v2052 = vadd.f32 0.0, %v2051
      %v2053 = vpop.f32.mrf.mxu0
      %2054 = vdwg.mxu0
      %v2055 = vadd.f32 %v1997, %v2039
      %v2056 = vadd.f32 %v1998, %v2052
      %s2057 = scalar_lea.vmem %s6, 4
      %v2058 = vld [vmem:[%s2057] sm:$0x3]
      %2060 = vset.pattern.permute.xlu0 0
      %2061 = vperm.xlu0 %2060, %v2058
      %v2062 = vpop.permute.xlu0 %2061
      %v2064 = vmul.f32 %v2055, %v2062
      %v2065 = vmul.f32 %v2056, %v2062
      %s2066 = scalar_lea.vmem %s7, 4
      %v2067 = vld [vmem:[%s2066] sm:$0x3]
      %2069 = vset.pattern.permute.xlu0 0
      %2070 = vperm.xlu0 %2069, %v2067
      %v2071 = vpop.permute.xlu0 %2070
      %v2073 = vadd.f32 %v2064, %v2071
      %v2074 = vadd.f32 %v2065, %v2071
      %v2075 = vmax.f32 %v2073, 0.0
      %v2076 = vmax.f32 %v2074, 0.0
      %v2077 = vpack.c.bf16 %v2076, %v2075
      %v2079 = vrot.slane %v2077, 6
      %2081 = vst [vmem:[#allocation2] sm:$0x44] %v2079
      %v2082 = vld [vmem:[%s8] sm:$0xf]
      %v2083 = vld [vmem:[%s8 + $0x4] sm:$0xf]
      %v2084 = vld [vmem:[%s8 + $0x8] sm:$0xf]
      %v2085 = vld [vmem:[%s8 + $0xc] sm:$0xf]
      %v2086 = vld [vmem:[#allocation2] sm:$0xff]
      %v2091 = vunpack.c.l.b16 %v2082
      %v2092 = vunpack.c.l.b16 %v2083
      %v2093 = vunpack.c.l.b16 %v2084
      %v2094 = vunpack.c.l.b16 %v2085
      %v2095 = vpack.c.b16 %v2092, %v2091
      %v2096 = vpack.c.b16 %v2094, %v2093
      %v2098 = vunpack.c.l.b16 %v2086
      %v2099 = vunpack.c.h.b16 %v2086
      %v2100 = vpack.c.b16 %v2098, %v2098
      %v2101 = vpack.c.b16 %v2099, %v2099
      %vm2102 = vcmask 64512
      %v2104 = vsel %vm2102, %v2095, 0
      %v2107 = vsel %vm2102, %v2096, 0
      %vm2109 = vcmask 1043456
      %v2111 = vsel %vm2109, %v2100, 0
      %v2114 = vsel %vm2109, %v2101, 0
      %2116 = vmatpush.bf16.msra.mxu0 0
      %2117 = vmatpush.bf16.msra.mxu0 0
      %2118 = vmatpush.bf16.msra.mxu0 0
      %2119 = vmatpush.bf16.msra.mxu0 0
      %2120 = vmatpush.bf16.msra.mxu0 0
      %2121 = vmatpush.bf16.msra.mxu0 0
      %2122 = vmatpush.bf16.msra.mxu0 0
      %2123 = vmatpush.bf16.msra.mxu0 %v2111
      %2124 = vmatmul.bf16.gmra.mxu0 %v2104
      %v2125 = vpop.f32.mrf.mxu0
      %v2126 = vadd.f32 0.0, %v2125
      %v2127 = vpop.f32.mrf.mxu0
      %v2128 = vadd.f32 0.0, %v2127
      %2129 = vmatmul.bf16.gmra.mxu0 %v2107
      %v2130 = vpop.f32.mrf.mxu0
      %v2131 = vadd.f32 0.0, %v2130
      %v2132 = vpop.f32.mrf.mxu0
      %v2133 = vadd.f32 0.0, %v2132
      %2134 = vdwg.mxu0
      %2135 = vmatpush.bf16.msra.mxu0 0
      %2136 = vmatpush.bf16.msra.mxu0 0
      %2137 = vmatpush.bf16.msra.mxu0 0
      %2138 = vmatpush.bf16.msra.mxu0 0
      %2139 = vmatpush.bf16.msra.mxu0 0
      %2140 = vmatpush.bf16.msra.mxu0 0
      %2141 = vmatpush.bf16.msra.mxu0 0
      %2142 = vmatpush.bf16.msra.mxu0 %v2114
      %2143 = vmatmul.bf16.gmra.mxu0 %v2104
      %v2144 = vpop.f32.mrf.mxu0
      %v2145 = vadd.f32 0.0, %v2144
      %v2146 = vpop.f32.mrf.mxu0
      %v2147 = vadd.f32 0.0, %v2146
      %2148 = vmatmul.bf16.gmra.mxu0 %v2107
      %v2149 = vpop.f32.mrf.mxu0
      %v2150 = vadd.f32 0.0, %v2149
      %v2151 = vpop.f32.mrf.mxu0
      %v2152 = vadd.f32 0.0, %v2151
      %2153 = vdwg.mxu0
      %v2154 = vld [vmem:[%s9] sm:$0xff]
      %v2155 = vld [vmem:[%s9 + $0x8] sm:$0xff]
      %v2156 = vld [vmem:[%s9 + $0x10] sm:$0xff]
      %v2157 = vld [vmem:[%s9 + $0x18] sm:$0xff]
      %2159 = vset.pattern.permute.xlu0 0
      %2160 = vperm.xlu0 %2159, %v2154
      %v2161 = vpop.permute.xlu0 %2160
      %2164 = vset.pattern.permute.xlu0 0
      %2165 = vperm.xlu0 %2164, %v2155
      %v2166 = vpop.permute.xlu0 %2165
      %2169 = vset.pattern.permute.xlu0 0
      %2170 = vperm.xlu0 %2169, %v2156
      %v2171 = vpop.permute.xlu0 %2170
      %2174 = vset.pattern.permute.xlu0 0
      %2175 = vperm.xlu0 %2174, %v2157
      %v2176 = vpop.permute.xlu0 %2175
      %v2178 = vmul.f32 %v2126, %v2161
      %v2179 = vmul.f32 %v2145, %v2161
      %v2180 = vmul.f32 %v2128, %v2166
      %v2181 = vmul.f32 %v2147, %v2166
      %v2182 = vmul.f32 %v2131, %v2171
      %v2183 = vmul.f32 %v2150, %v2171
      %v2184 = vmul.f32 %v2133, %v2176
      %v2185 = vmul.f32 %v2152, %v2176
      %v2186 = vld [vmem:[%s10] sm:$0xff]
      %v2187 = vld [vmem:[%s10 + $0x8] sm:$0xff]
      %v2188 = vld [vmem:[%s10 + $0x10] sm:$0xff]
      %v2189 = vld [vmem:[%s10 + $0x18] sm:$0xff]
      %2191 = vset.pattern.permute.xlu0 0
      %2192 = vperm.xlu0 %2191, %v2186
      %v2193 = vpop.permute.xlu0 %2192
      %2196 = vset.pattern.permute.xlu0 0
      %2197 = vperm.xlu0 %2196, %v2187
      %v2198 = vpop.permute.xlu0 %2197
      %2201 = vset.pattern.permute.xlu0 0
      %2202 = vperm.xlu0 %2201, %v2188
      %v2203 = vpop.permute.xlu0 %2202
      %2206 = vset.pattern.permute.xlu0 0
      %2207 = vperm.xlu0 %2206, %v2189
      %v2208 = vpop.permute.xlu0 %2207
      %v2210 = vadd.f32 %v2178, %v2193
      %v2211 = vadd.f32 %v2179, %v2193
      %v2212 = vadd.f32 %v2180, %v2198
      %v2213 = vadd.f32 %v2181, %v2198
      %v2214 = vadd.f32 %v2182, %v2203
      %v2215 = vadd.f32 %v2183, %v2203
      %v2216 = vadd.f32 %v2184, %v2208
      %v2217 = vadd.f32 %v2185, %v2208
      %v2218 = vunpack.c.l.bf16 %v388
      %v2219 = vunpack.c.h.bf16 %v388
      %v2220 = vunpack.c.l.bf16 %v389
      %v2221 = vunpack.c.h.bf16 %v389
      %v2222 = vunpack.c.l.bf16 %v390
      %v2223 = vunpack.c.h.bf16 %v390
      %v2224 = vunpack.c.l.bf16 %v391
      %v2225 = vunpack.c.h.bf16 %v391
      %v2226 = vadd.f32 %v2210, %v2218
      %v2227 = vadd.f32 %v2211, %v2219
      %v2228 = vadd.f32 %v2212, %v2220
      %v2229 = vadd.f32 %v2213, %v2221
      %v2230 = vadd.f32 %v2214, %v2222
      %v2231 = vadd.f32 %v2215, %v2223
      %v2232 = vadd.f32 %v2216, %v2224
      %v2233 = vadd.f32 %v2217, %v2225
      %v2234 = vmax.f32 %v2226, 0.0
      %v2235 = vmax.f32 %v2227, 0.0
      %v2236 = vmax.f32 %v2228, 0.0
      %v2237 = vmax.f32 %v2229, 0.0
      %v2238 = vmax.f32 %v2230, 0.0
      %v2239 = vmax.f32 %v2231, 0.0
      %v2240 = vmax.f32 %v2232, 0.0
      %v2241 = vmax.f32 %v2233, 0.0
      %v2242 = vpack.c.bf16 %v2235, %v2234
      %v2243 = vpack.c.bf16 %v2237, %v2236
      %v2244 = vpack.c.bf16 %v2239, %v2238
      %v2245 = vpack.c.bf16 %v2241, %v2240
      %2246 = vst [vmem:[%s386] sm:$0xff] %v2242
      %2247 = vst [vmem:[%s386 + $0x8] sm:$0xff] %v2243
      %2248 = vst [vmem:[%s386 + $0x10] sm:$0xff] %v2244
      %2249 = vst [vmem:[%s386 + $0x18] sm:$0xff] %v2245
      %p2250 = scmp.lt.s32.totalorder %s22, 1
      %s2251 = scalar_select %p2250, %s22, 1
      %s2252 = smul.addr %s2251, 8
      %s2253 = smul.addr %s2252, 4
      %s2254 = scalar_lea.vmem %s11, %s2253
      // Predicated region
      $region65: #{bottle2neck_forward.1} parent=63 // pred_check
        %p2255 = pneg %p276
      $region66: #{bottle2neck_forward.1} parent=63 // pred_check_branch
        %2257 = sbr.rel (%p2255) target = $region68
      $region67: #{bottle2neck_forward.1} parent=63 // pred_region
        _
      $region68: #{bottle2neck_forward.1} parent=63 // pred_fallthru
        _
    $region64: #{bottle2neck_forward.1} parent=5 // pred_fallthru
      _
    %p2258 = scmp.le.s32.totalorder 2, %s17
    // Predicated region
    $region69: #{bottle2neck_forward.1} parent=5 // pred_check
      %p2259 = pneg %p2258
    $region70: #{bottle2neck_forward.1} parent=5 // pred_check_branch
      %2261 = sbr.rel (%p2259) target = $region72
    $region71: #{bottle2neck_forward.1} parent=5 // pred_region
      %s2262 = ssub.s32 %s17, 2
      // Predicated region
      $region73: #{bottle2neck_forward.1} parent=71 // pred_check
        %p2263 = pneg %p282
      $region74: #{bottle2neck_forward.1} parent=71 // pred_check_branch
        %2265 = sbr.rel (%p2263) target = $region76
      $region75: #{bottle2neck_forward.1} parent=71 // pred_region
        %p2266 = scmp.lt.s32.totalorder %s23, 1
        %s2267 = scalar_select %p2266, %s23, 1
        %s2268 = smul.addr %s2267, 8
        %s2269 = smul.addr %s2268, 4
        %s2270 = scalar_lea.vmem %s11, %s2269
      $region76: #{bottle2neck_forward.1} parent=71 // pred_fallthru
        _
    $region72: #{bottle2neck_forward.1} parent=5 // pred_fallthru
      _
  $region6: #{bottle2neck_forward.1} parent=0 // loop_footer
    %s21 = sadd.s32 1, %s17
  $region7: #{bottle2neck_forward.1} parent=0 // loop_footer_branch
    %16 = sbr.rel target = $region3
  $region8: #{bottle2neck_forward.1} parent=0 // loop_exit
    _

</llo_original>
